<compile_context>
chip_gen: v5e
topology: v5e:2x2
jax: 0.10.0
libtpu: 0.0.40
codegen_flags: <defaults>
</compile_context>

<pallas_src>
import functools

import jax
import jax.numpy as jnp
from jax.experimental import pallas as pl
from jax.experimental.pallas import tpu as pltpu

_LN_EPS = 1e-5


def _layer_norm(x, ln_w, ln_b):
    mean = jnp.mean(x, axis=-1, keepdims=True)
    c = x - mean
    var = jnp.mean(c * c, axis=-1, keepdims=True)
    return c * jax.lax.rsqrt(var + _LN_EPS) * ln_w + ln_b


# --------------------------------------------------------------------------------------
# Kernel
# --------------------------------------------------------------------------------------
def rwkv6_ffn_kernel(
    x_ref,      # (TM, H)  pre-LN input tile (also the residual)
    carry_ref,  # (1, H)   normalized carry row for this tile's time shift
    p_ref,      # (4, H)   [ln_w, ln_b, time_maa_k, time_maa_r]
    kw_ref,     # (H, TI)  key.weight.T slice       (matmul dtype)
    vw_ref,     # (TI, H)  value.weight.T slice     (matmul dtype)
    rw_ref,     # (H, H)   receptance.weight.T      (matmul dtype)
    out_ref,    # (TM, H)  output tile
    acc_ref,    # VMEM (TM, H) f32 — value accumulator over I chunks
    xk_ref,     # VMEM (TM, H) matmul dtype — key-mix stash (cast once per tile)
    r_ref,      # VMEM (TM, H) f32 — sigmoid(receptance), computed in the prologue
):
    j = pl.program_id(1)
    nj = pl.num_programs(1)
    wdt = kw_ref.dtype
    tm = x_ref.shape[0]

    # ------------- prologue (once per T tile): LN, time shift, mixes, receptance -------
    @pl.when(j == 0)
    def _prologue():
        p = p_ref[...]
        ln_w, ln_b = p[0:1, :], p[1:2, :]
        tmk, tmr = p[2:3, :], p[3:4, :]

        xn = _layer_norm(x_ref[...], ln_w, ln_b)

        # Time shift: past[t] = xn[t-1]; row 0 comes from the (already normalized)
        # cross-tile carry computed in the wrapper.
        row0 = jax.lax.broadcasted_iota(jnp.int32, (tm, 1), 0) == 0
        past = jnp.where(row0, carry_ref[...], pltpu.roll(xn, shift=1, axis=0))
        sx = past - xn

        # Key mix -> stash once in the MXU operand dtype (no per-j cast / f32 traffic).
        xk_ref[...] = (xn + sx * tmk).astype(wdt)

        # Receptance matmul + sigmoid hoisted into the prologue (overlaps with the first
        # kw/vw DMA instead of serializing after the last accumulation step).
        xr = (xn + sx * tmr).astype(wdt)
        r_ref[...] = jax.nn.sigmoid(
            jnp.dot(xr, rw_ref[...], preferred_element_type=jnp.float32))

    # -------- body (every j): accumulate value over the intermediate-dim chunk ----------
    k = jnp.dot(xk_ref[...], kw_ref[...], preferred_element_type=jnp.float32)
    k = jnp.maximum(k, 0.0)
    k = k * k                                                    # relu(xk @ Wk)^2 chunk
    prod = jnp.dot(k.astype(wdt), vw_ref[...], preferred_element_type=jnp.float32)

    @pl.when(j == 0)
    def _init():
        acc_ref[...] = prod            # first chunk initializes (no zero-fill + RMW)

    @pl.when(j != 0)
    def _accum():
        acc_ref[...] += prod

    # ------------------ epilogue (last j): pure VPU gate + residual ---------------------
    @pl.when(j == nj - 1)
    def _epilogue():
        out_ref[...] = (r_ref[...] * acc_ref[...] + x_ref[...]).astype(out_ref.dtype)


# --------------------------------------------------------------------------------------
# Tile selection / VMEM accounting
# --------------------------------------------------------------------------------------
def _vmem_capacity_bytes():
    try:
        return int(pltpu.get_tpu_info().vmem_capacity_bytes)
    except Exception:  # pragma: no cover - conservative fallback (v7x per-core VMEM)
        return 64 * 1024 * 1024


def _vmem_estimate(tm, ti, h, wbytes):
    """Conservative VMEM working-set estimate (everything double-buffered)."""
    return (4 * tm * h * 4                              # x + out tiles (2x buffered, f32)
            + 2 * (h * ti + ti * h + h * h) * wbytes    # kw/vw/rw blocks (2x buffered)
            + tm * h * (8 + wbytes)                     # scratch: acc(f32) + r(f32) + xk(wdt)
            + 32 * h * 4)                               # carry / param slabs


def _divisors_leq(n, cap, quantum):
    """Divisors of n that are <= cap and multiples of `quantum` (plus n itself if it
    fits), descending.  Falls back to [n] (single tile) if nothing aligned exists."""
    n, cap = int(n), min(int(cap), int(n))
    out = [d for d in range(quantum, cap + 1, quantum) if n % d == 0]
    if n <= cap and n not in out:
        out.append(n)
    out.sort(reverse=True)
    return out or [n]


def _select_tiles(t, h, i_dim, wbytes, budget, tm_cap, ti_cap, allow_resident):
    tm_opts = _divisors_leq(t, tm_cap, 8)
    # 1) Weights fully VMEM-resident (TI == I): kw/vw block index becomes constant, so
    #    they are DMA'd once for the whole call (v5e/v6e with moderate H; small H on v7x).
    if allow_resident:
        for tm_ in tm_opts:
            if tm_ >= min(t, 128) and _vmem_estimate(tm_, i_dim, h, wbytes) <= budget:
                return tm_, i_dim
    # 2) Stream the intermediate dim; maximize TM so the per-tile kw/vw HBM stream is
    #    amortized over as much MXU work as possible (primary roofline lever).
    ti_opts = _divisors_leq(i_dim, ti_cap, 128)
    for tm_ in tm_opts:
        for ti_ in ti_opts:
            if _vmem_estimate(tm_, ti_, h, wbytes) <= budget:
                return tm_, ti_
    # 3) Last resort: smallest aligned tiles; let the compiler arbitrate the fit.
    return tm_opts[-1], ti_opts[-1]


# --------------------------------------------------------------------------------------
# Wrapper
# --------------------------------------------------------------------------------------
def prepare_params(params, matmul_dtype=jnp.bfloat16):
    """One-time parameter prep (call OUTSIDE the per-step jit): pre-transpose linear
    weights to (in, out) in the MXU dtype and stack the per-channel vectors into one
    (4, H) slab (single DMA)."""
    h = params["ln2_w"].shape[-1]
    pslab = jnp.stack([
        params["ln2_w"].reshape(h),
        params["ln2_b"].reshape(h),
        params["time_maa_k"].reshape(h),
        params["time_maa_r"].reshape(h),
    ]).astype(jnp.float32)
    return {
        "pslab": pslab,                                                   # (4, H) f32
        "kw_t": jnp.asarray(params["key_w"]).T.astype(matmul_dtype),      # (H, I)
        "vw_t": jnp.asarray(params["value_w"]).T.astype(matmul_dtype),    # (I, H)
        "rw_t": jnp.asarray(params["receptance_w"]).T.astype(matmul_dtype),  # (H, H)
    }


@functools.partial(jax.jit, static_argnames=("tm", "ti"))
def rwkv6_feed_forward(x, state, prep, *, tm=None, ti=None):
    """x: (1, T, H) f32; state: (1, H) f32.  Returns (out (1,T,H) f32, state_out (1,H) f32).

    `tm` / `ti` are optional caps on the T tile and intermediate-dim chunk; by default the
    tiles are chosen automatically against the device's physical VMEM capacity."""
    b, t, h = x.shape
    assert b == 1, "Rwkv6FeedForward requires batch_size == 1"
    i_dim = prep["kw_t"].shape[1]
    wbytes = jnp.dtype(prep["kw_t"].dtype).itemsize

    vmem_cap = _vmem_capacity_bytes()
    budget = int(0.75 * vmem_cap)
    tm_sel, ti_sel = _select_tiles(
        t, h, i_dim, wbytes, budget,
        tm_cap=(1024 if tm is None else tm),
        ti_cap=(512 if ti is None else ti),
        allow_resident=(ti is None or ti >= i_dim))
    nti, nj = t // tm_sel, i_dim // ti_sel

    x2d = x[0].astype(jnp.float32)
    ln_w, ln_b = prep["pslab"][0], prep["pslab"][1]

    # Tiny wrapper-side LN over the last pre-LN row of each T tile: gives every tile its
    # normalized time-shift carry and the final state_out (no per-tile HBM writebacks).
    lasts = x2d.reshape(nti, tm_sel, h)[:, tm_sel - 1, :]                 # (nti, H)
    lasts_n = _layer_norm(lasts, ln_w, ln_b)
    state_out = lasts_n[nti - 1:nti, :]                                   # (1, H)
    carry = jnp.concatenate(
        [state.astype(jnp.float32), lasts_n[:nti - 1]], axis=0)[:, None, :]  # (nti,1,H)

    est = _vmem_estimate(tm_sel, ti_sel, h, wbytes)
    vmem_limit = int(min(vmem_cap, max(32 * 1024 * 1024, int(est * 1.6) + (2 << 20))))

    out = pl.pallas_call(
        rwkv6_ffn_kernel,
        grid=(nti, nj),
        in_specs=[
            pl.BlockSpec((tm_sel, h), lambda i, j: (i, 0)),          # x tile
            pl.BlockSpec((None, 1, h), lambda i, j: (i, 0, 0)),      # normalized carry row
            pl.BlockSpec((4, h), lambda i, j: (0, 0)),               # param slab (resident)
            pl.BlockSpec((h, ti_sel), lambda i, j: (0, j)),          # key.weight.T slice
            pl.BlockSpec((ti_sel, h), lambda i, j: (j, 0)),          # value.weight.T slice
            pl.BlockSpec((h, h), lambda i, j: (0, 0)),               # receptance.weight.T
        ],
        out_specs=pl.BlockSpec((tm_sel, h), lambda i, j: (i, 0)),    # out tile
        out_shape=jax.ShapeDtypeStruct((t, h), jnp.float32),
        scratch_shapes=[
            pltpu.VMEM((tm_sel, h), jnp.float32),                    # value accumulator
            pltpu.VMEM((tm_sel, h), prep["kw_t"].dtype),             # xk stash (MXU dtype)
            pltpu.VMEM((tm_sel, h), jnp.float32),                    # sigmoid(receptance)
        ],
        compiler_params=pltpu.CompilerParams(
            dimension_semantics=("parallel", "arbitrary"),
            vmem_limit_bytes=vmem_limit,
        ),
    )(x2d, carry, prep["pslab"], prep["kw_t"], prep["vw_t"], prep["rw_t"])

    return out[None], state_out


# --------------------------------------------------------------------------------------
# Pure-JAX reference and self-test
# --------------------------------------------------------------------------------------
def reference_forward(x, state, params):
    """Pure-JAX f32 reference mirroring the PyTorch forward (highest-precision matmuls)."""
    hp = jax.lax.Precision.HIGHEST
    xn = (x - jnp.mean(x, -1, keepdims=True)) * jax.lax.rsqrt(
        jnp.var(x, -1, keepdims=True) + _LN_EPS) * params["ln2_w"] + params["ln2_b"]
    past = jnp.concatenate([state[:, None, :], xn[:, :-1, :]], axis=1)
    sx = past - xn
    xk = xn + sx * params["time_maa_k"]
    xr = xn + sx * params["time_maa_r"]
    key = jnp.maximum(jnp.matmul(xk, params["key_w"].T, precision=hp), 0.0) ** 2
    value = jnp.matmul(key, params["value_w"].T, precision=hp)
    receptance = jax.nn.sigmoid(jnp.matmul(xr, params["receptance_w"].T, precision=hp))
    return receptance * value + x, xn[:, -1, :]


if __name__ == "__main__":
    # Small shapes; forced-tile run exercises grid = (T/TM=4, I/TI=2) (cross-tile time
    # shift + intermediate-dim accumulation), auto run exercises the resident-weight path.
    hidden_size = 64
    intermediate_size = 256
    seq_len = 256
    batch = 1  # module asserts batch_size == 1

    key = jax.random.PRNGKey(0)
    ks = jax.random.split(key, 9)
    params = {
        "time_maa_k":    jax.random.uniform(ks[0], (hidden_size,), jnp.float32),
        "time_maa_r":    jax.random.uniform(ks[1], (hidden_size,), jnp.float32),
        "key_w":         0.1 * jax.random.normal(ks[2], (intermediate_size, hidden_size), jnp.float32),
        "receptance_w":  0.1 * jax.random.normal(ks[3], (hidden_size, hidden_size), jnp.float32),
        "value_w":       0.1 * jax.random.normal(ks[4], (hidden_size, intermediate_size), jnp.float32),
        "ln2_w":         1.0 + 0.01 * jax.random.normal(ks[5], (hidden_size,), jnp.float32),
        "ln2_b":         0.01 * jax.random.normal(ks[6], (hidden_size,), jnp.float32),
    }
    x = jax.random.normal(ks[7], (batch, seq_len, hidden_size), jnp.float32)
    state = jax.random.normal(ks[8], (batch, hidden_size), jnp.float32)

    ref_out, ref_state = reference_forward(x, state, params)

    # f32 matmul path, forced multi-tile (streamed I): tight structural check.
    prep_f32 = prepare_params(params, matmul_dtype=jnp.float32)
    out_a, st_a = rwkv6_feed_forward(x, state, prep_f32, tm=64, ti=128)
    jax.block_until_ready((out_a, st_a))
    assert jnp.allclose(out_a, ref_out, atol=1e-3, rtol=1e-3), "f32 streamed output mismatch"
    assert jnp.allclose(st_a, ref_state, atol=1e-3, rtol=1e-3), "f32 streamed state mismatch"

    # f32 matmul path, auto tiles (weights VMEM-resident, large T tile).
    out_b, st_b = rwkv6_feed_forward(x, state, prep_f32)
    jax.block_until_ready((out_b, st_b))
    assert jnp.allclose(out_b, ref_out, atol=1e-3, rtol=1e-3), "f32 resident output mismatch"
    assert jnp.allclose(st_b, ref_state, atol=1e-3, rtol=1e-3), "f32 resident state mismatch"

    # bf16 matmul path (production config: bf16 MXU operands, f32 accumulation).
    prep_bf16 = prepare_params(params, matmul_dtype=jnp.bfloat16)
    out_c, st_c = rwkv6_feed_forward(x, state, prep_bf16, tm=64, ti=128)
    jax.block_until_ready((out_c, st_c))
    assert jnp.allclose(out_c, ref_out, atol=5e-2, rtol=5e-2), "bf16 output mismatch"
    assert jnp.allclose(st_c, ref_state, atol=5e-2, rtol=5e-2), "bf16 state mismatch"

    print("KERNEL_OK")
</pallas_src>

<mosaic_0001>
module attributes {stable_mosaic.version = 11 : i64} {
  func.func @rwkv6_ffn_kernel(%arg0: i32, %arg1: i32, %arg2: memref<64x64xf32, #tpu.memory_space<vmem>>, %arg3: memref<1x1x64xf32, #tpu.memory_space<vmem>>, %arg4: memref<4x64xf32, #tpu.memory_space<vmem>>, %arg5: memref<64x128xf32, #tpu.memory_space<vmem>>, %arg6: memref<128x64xf32, #tpu.memory_space<vmem>>, %arg7: memref<64x64xf32, #tpu.memory_space<vmem>>, %arg8: memref<64x64xf32, #tpu.memory_space<vmem>>, %arg9: memref<64x64xf32, #tpu.memory_space<vmem>>, %arg10: memref<64x64xf32, #tpu.memory_space<vmem>>, %arg11: memref<64x64xf32, #tpu.memory_space<vmem>>) attributes {dimension_semantics = [#tpu.dimension_semantics<parallel>, #tpu.dimension_semantics<arbitrary>], iteration_bounds = array<i64: 4, 2>, scalar_prefetch = 0 : i64, scratch_operands = 3 : i64, tpu.core_type = #tpu.core_type<tc>, window_params = [{transform_indices = @transform_0, window_bounds = array<i64: 64, 64>}, {transform_indices = @transform_1, window_bounds = array<i64: 1, 1, 64>}, {pipeline_mode = #tpu.pipeline_mode<synchronous>, transform_indices = @transform_2, window_bounds = array<i64: 4, 64>}, {transform_indices = @transform_3, window_bounds = array<i64: 64, 128>}, {transform_indices = @transform_4, window_bounds = array<i64: 128, 64>}, {pipeline_mode = #tpu.pipeline_mode<synchronous>, transform_indices = @transform_5, window_bounds = array<i64: 64, 64>}, {transform_indices = @transform_6, window_bounds = array<i64: 64, 64>}]} {
    %c0_i32 = arith.constant 0 : i32
    %0 = arith.cmpi eq, %arg1, %c0_i32 : i32
    %1 = arith.extui %0 : i1 to i32
    %c0_i32_0 = arith.constant 0 : i32
    %2 = arith.cmpi ne, %1, %c0_i32_0 : i32
    scf.if %2 {
      %c0_13 = arith.constant 0 : index
      %c0_14 = arith.constant 0 : index
      %20 = vector.load %arg4[%c0_13, %c0_14] : memref<4x64xf32, #tpu.memory_space<vmem>>, vector<4x64xf32>
      %21 = vector.extract_strided_slice %20 {offsets = [0, 0], sizes = [1, 64], strides = [1, 1]} : vector<4x64xf32> to vector<1x64xf32>
      %22 = vector.extract_strided_slice %20 {offsets = [1, 0], sizes = [1, 64], strides = [1, 1]} : vector<4x64xf32> to vector<1x64xf32>
      %23 = vector.extract_strided_slice %20 {offsets = [2, 0], sizes = [1, 64], strides = [1, 1]} : vector<4x64xf32> to vector<1x64xf32>
      %24 = vector.extract_strided_slice %20 {offsets = [3, 0], sizes = [1, 64], strides = [1, 1]} : vector<4x64xf32> to vector<1x64xf32>
      %c0_15 = arith.constant 0 : index
      %c0_16 = arith.constant 0 : index
      %25 = vector.load %arg2[%c0_15, %c0_16] : memref<64x64xf32, #tpu.memory_space<vmem>>, vector<64x64xf32>
      %cst_17 = arith.constant dense<0.000000e+00> : vector<64xf32>
      %26 = vector.multi_reduction <add>, %25, %cst_17 [1] : vector<64x64xf32> to vector<64xf32>
      %27 = vector.shape_cast %26 : vector<64xf32> to vector<64x1xf32>
      %cst_18 = arith.constant 6.400000e+01 : f32
      %28 = vector.broadcast %cst_18 : f32 to vector<64x1xf32>
      %29 = arith.divf %27, %28 : vector<64x1xf32>
      %30 = vector.broadcast %29 : vector<64x1xf32> to vector<64x64xf32>
      %31 = arith.subf %25, %30 : vector<64x64xf32>
      %32 = arith.mulf %31, %31 : vector<64x64xf32>
      %cst_19 = arith.constant dense<0.000000e+00> : vector<64xf32>
      %33 = vector.multi_reduction <add>, %32, %cst_19 [1] : vector<64x64xf32> to vector<64xf32>
      %34 = vector.shape_cast %33 : vector<64xf32> to vector<64x1xf32>
      %cst_20 = arith.constant 6.400000e+01 : f32
      %35 = vector.broadcast %cst_20 : f32 to vector<64x1xf32>
      %36 = arith.divf %34, %35 : vector<64x1xf32>
      %cst_21 = arith.constant 9.99999974E-6 : f32
      %37 = vector.broadcast %cst_21 : f32 to vector<64x1xf32>
      %38 = arith.addf %36, %37 : vector<64x1xf32>
      %39 = math.rsqrt %38 : vector<64x1xf32>
      %40 = vector.broadcast %39 : vector<64x1xf32> to vector<64x64xf32>
      %41 = arith.mulf %31, %40 : vector<64x64xf32>
      %42 = vector.broadcast %21 : vector<1x64xf32> to vector<64x64xf32>
      %43 = arith.mulf %41, %42 : vector<64x64xf32>
      %44 = vector.broadcast %22 : vector<1x64xf32> to vector<64x64xf32>
      %45 = arith.addf %43, %44 : vector<64x64xf32>
      %46 = tpu.iota {dimensions = array<i32: 0>} : vector<64x1xi32>
      %c0_i32_22 = arith.constant 0 : i32
      %47 = vector.broadcast %c0_i32_22 : i32 to vector<64x1xi32>
      %48 = arith.cmpi eq, %46, %47 : vector<64x1xi32>
      %c0_23 = arith.constant 0 : index
      %c0_24 = arith.constant 0 : index
      %c0_25 = arith.constant 0 : index
      %49 = vector.load %arg3[%c0_23, %c0_24, %c0_25] : memref<1x1x64xf32, #tpu.memory_space<vmem>>, vector<1x1x64xf32>
      %50 = vector.shape_cast %49 : vector<1x1x64xf32> to vector<1x64xf32>
      %c1_i32_26 = arith.constant 1 : i32
      %51 = tpu.dynamic_rotate %45 by %c1_i32_26 dim 0 : vector<64x64xf32>, i32 -> vector<64x64xf32>
      %52 = vector.shape_cast %48 : vector<64x1xi1> to vector<64x1xi1>
      %53 = vector.broadcast %52 : vector<64x1xi1> to vector<64x64xi1>
      %54 = vector.shape_cast %50 : vector<1x64xf32> to vector<1x64xf32>
      %55 = vector.broadcast %54 : vector<1x64xf32> to vector<64x64xf32>
      %56 = arith.select %53, %55, %51 : vector<64x64xi1>, vector<64x64xf32>
      %57 = arith.subf %56, %45 : vector<64x64xf32>
      %58 = vector.broadcast %23 : vector<1x64xf32> to vector<64x64xf32>
      %59 = arith.mulf %57, %58 : vector<64x64xf32>
      %60 = arith.addf %45, %59 : vector<64x64xf32>
      %c0_27 = arith.constant 0 : index
      %c0_28 = arith.constant 0 : index
      %61 = vector.load %arg10[%c0_27, %c0_28] : memref<64x64xf32, #tpu.memory_space<vmem>>, vector<64x64xf32>
      tpu.vector_store %arg10[%c0_27, %c0_28], %60 {strides = array<i32>} : memref<64x64xf32, #tpu.memory_space<vmem>>, vector<64x64xf32>,
      %62 = vector.broadcast %24 : vector<1x64xf32> to vector<64x64xf32>
      %63 = arith.mulf %57, %62 : vector<64x64xf32>
      %64 = arith.addf %45, %63 : vector<64x64xf32>
      %c0_29 = arith.constant 0 : index
      %c0_30 = arith.constant 0 : index
      %65 = vector.load %arg7[%c0_29, %c0_30] : memref<64x64xf32, #tpu.memory_space<vmem>>, vector<64x64xf32>
      %cst_31 = arith.constant dense<0.000000e+00> : vector<64x64xf32>
      %66 = tpu.matmul %64, %65, %cst_31 {dimension_numbers = #tpu.dot_dimension_numbers<[1], [0], [0], [1], [0, 0, 1, 1], [], []>} : vector<64x64xf32>, vector<64x64xf32>, vector<64x64xf32> -> vector<64x64xf32>
      %67 = arith.negf %66 : vector<64x64xf32>
      %68 = math.exp %67 : vector<64x64xf32>
      %cst_32 = arith.constant 1.000000e+00 : f32
      %69 = vector.broadcast %cst_32 : f32 to vector<64x64xf32>
      %70 = arith.addf %69, %68 : vector<64x64xf32>
      %71 = arith.divf %69, %70 : vector<64x64xf32>
      %c0_33 = arith.constant 0 : index
      %c0_34 = arith.constant 0 : index
      %72 = vector.load %arg11[%c0_33, %c0_34] : memref<64x64xf32, #tpu.memory_space<vmem>>, vector<64x64xf32>
      tpu.vector_store %arg11[%c0_33, %c0_34], %71 {strides = array<i32>} : memref<64x64xf32, #tpu.memory_space<vmem>>, vector<64x64xf32>,
    } else {
    }
    %c0 = arith.constant 0 : index
    %c0_1 = arith.constant 0 : index
    %3 = vector.load %arg10[%c0, %c0_1] : memref<64x64xf32, #tpu.memory_space<vmem>>, vector<64x64xf32>
    %c0_2 = arith.constant 0 : index
    %c0_3 = arith.constant 0 : index
    %4 = vector.load %arg5[%c0_2, %c0_3] : memref<64x128xf32, #tpu.memory_space<vmem>>, vector<64x128xf32>
    %cst = arith.constant dense<0.000000e+00> : vector<64x128xf32>
    %5 = tpu.matmul %3, %4, %cst {dimension_numbers = #tpu.dot_dimension_numbers<[1], [0], [0], [1], [0, 0, 1, 1], [], []>} : vector<64x64xf32>, vector<64x128xf32>, vector<64x128xf32> -> vector<64x128xf32>
    %cst_4 = arith.constant 0.000000e+00 : f32
    %6 = vector.broadcast %cst_4 : f32 to vector<64x128xf32>
    %7 = arith.maximumf %5, %6 : vector<64x128xf32>
    %8 = arith.mulf %7, %7 : vector<64x128xf32>
    %c0_5 = arith.constant 0 : index
    %c0_6 = arith.constant 0 : index
    %9 = vector.load %arg6[%c0_5, %c0_6] : memref<128x64xf32, #tpu.memory_space<vmem>>, vector<128x64xf32>
    %cst_7 = arith.constant dense<0.000000e+00> : vector<64x64xf32>
    %10 = tpu.matmul %8, %9, %cst_7 {dimension_numbers = #tpu.dot_dimension_numbers<[1], [0], [0], [1], [0, 0, 1, 1], [], []>} : vector<64x128xf32>, vector<128x64xf32>, vector<64x64xf32> -> vector<64x64xf32>
    %c0_i32_8 = arith.constant 0 : i32
    %11 = arith.cmpi eq, %arg1, %c0_i32_8 : i32
    %12 = arith.extui %11 : i1 to i32
    %c0_i32_9 = arith.constant 0 : i32
    %13 = arith.cmpi ne, %12, %c0_i32_9 : i32
    scf.if %13 {
      %c0_13 = arith.constant 0 : index
      %c0_14 = arith.constant 0 : index
      %20 = vector.load %arg9[%c0_13, %c0_14] : memref<64x64xf32, #tpu.memory_space<vmem>>, vector<64x64xf32>
      tpu.vector_store %arg9[%c0_13, %c0_14], %10 {strides = array<i32>} : memref<64x64xf32, #tpu.memory_space<vmem>>, vector<64x64xf32>,
    } else {
    }
    %c0_i32_10 = arith.constant 0 : i32
    %14 = arith.cmpi ne, %arg1, %c0_i32_10 : i32
    %15 = arith.extui %14 : i1 to i32
    %c0_i32_11 = arith.constant 0 : i32
    %16 = arith.cmpi ne, %15, %c0_i32_11 : i32
    scf.if %16 {
      %c0_13 = arith.constant 0 : index
      %c0_14 = arith.constant 0 : index
      %20 = vector.load %arg9[%c0_13, %c0_14] : memref<64x64xf32, #tpu.memory_space<vmem>>, vector<64x64xf32>
      %21 = arith.addf %20, %10 : vector<64x64xf32>
      %c0_15 = arith.constant 0 : index
      %c0_16 = arith.constant 0 : index
      %22 = vector.load %arg9[%c0_15, %c0_16] : memref<64x64xf32, #tpu.memory_space<vmem>>, vector<64x64xf32>
      tpu.vector_store %arg9[%c0_15, %c0_16], %21 {strides = array<i32>} : memref<64x64xf32, #tpu.memory_space<vmem>>, vector<64x64xf32>,
    } else {
    }
    %c1_i32 = arith.constant 1 : i32
    %17 = arith.cmpi eq, %arg1, %c1_i32 : i32
    %18 = arith.extui %17 : i1 to i32
    %c0_i32_12 = arith.constant 0 : i32
    %19 = arith.cmpi ne, %18, %c0_i32_12 : i32
    scf.if %19 {
      %c0_13 = arith.constant 0 : index
      %c0_14 = arith.constant 0 : index
      %20 = vector.load %arg11[%c0_13, %c0_14] : memref<64x64xf32, #tpu.memory_space<vmem>>, vector<64x64xf32>
      %c0_15 = arith.constant 0 : index
      %c0_16 = arith.constant 0 : index
      %21 = vector.load %arg9[%c0_15, %c0_16] : memref<64x64xf32, #tpu.memory_space<vmem>>, vector<64x64xf32>
      %22 = arith.mulf %20, %21 : vector<64x64xf32>
      %c0_17 = arith.constant 0 : index
      %c0_18 = arith.constant 0 : index
      %23 = vector.load %arg2[%c0_17, %c0_18] : memref<64x64xf32, #tpu.memory_space<vmem>>, vector<64x64xf32>
      %24 = arith.addf %22, %23 : vector<64x64xf32>
      %c0_19 = arith.constant 0 : index
      %c0_20 = arith.constant 0 : index
      %25 = vector.load %arg8[%c0_19, %c0_20] : memref<64x64xf32, #tpu.memory_space<vmem>>, vector<64x64xf32>
      tpu.vector_store %arg8[%c0_19, %c0_20], %24 {strides = array<i32>} : memref<64x64xf32, #tpu.memory_space<vmem>>, vector<64x64xf32>,
    } else {
    }
    return
  }
  func.func @transform_0(%arg0: i32, %arg1: i32) -> (i32, i32) {
    %c0_i32 = arith.constant 0 : i32
    %c0_i32_0 = arith.constant 0 : i32
    return %arg0, %c0_i32 : i32, i32
  }
  func.func @transform_1(%arg0: i32, %arg1: i32) -> (i32, i32, i32) {
    %c0_i32 = arith.constant 0 : i32
    %c0_i32_0 = arith.constant 0 : i32
    %c0_i32_1 = arith.constant 0 : i32
    return %arg0, %c0_i32, %c0_i32_0 : i32, i32, i32
  }
  func.func @transform_2(%arg0: i32, %arg1: i32) -> (i32, i32) {
    %c0_i32 = arith.constant 0 : i32
    %c0_i32_0 = arith.constant 0 : i32
    %c0_i32_1 = arith.constant 0 : i32
    return %c0_i32, %c0_i32_0 : i32, i32
  }
  func.func @transform_3(%arg0: i32, %arg1: i32) -> (i32, i32) {
    %c0_i32 = arith.constant 0 : i32
    %c0_i32_0 = arith.constant 0 : i32
    return %c0_i32, %arg1 : i32, i32
  }
  func.func @transform_4(%arg0: i32, %arg1: i32) -> (i32, i32) {
    %c0_i32 = arith.constant 0 : i32
    %c0_i32_0 = arith.constant 0 : i32
    return %arg1, %c0_i32 : i32, i32
  }
  func.func @transform_5(%arg0: i32, %arg1: i32) -> (i32, i32) {
    %c0_i32 = arith.constant 0 : i32
    %c0_i32_0 = arith.constant 0 : i32
    %c0_i32_1 = arith.constant 0 : i32
    return %c0_i32, %c0_i32_0 : i32, i32
  }
  func.func @transform_6(%arg0: i32, %arg1: i32) -> (i32, i32) {
    %c0_i32 = arith.constant 0 : i32
    %c0_i32_0 = arith.constant 0 : i32
    return %arg0, %c0_i32 : i32, i32
  }
}

</mosaic_0001>

<llo_original>
// kernel: squeeze.4
$region0: #{squeeze.4}
  %s0 = inlined_call_operand.vmem [shape: f32[1,256,64], index: 0, kind: input, shape index: {}]
  %s1 = inlined_call_operand.vmem [shape: f32[4,64,64], index: 1, kind: output, shape index: {}]
  $region1: #{squeeze.4} parent=0
    #allocation0 [shape = 'u8[262144]{0}', space=vmem, size = 0x40000, scoped, tag = 'scoped mem for output reshape']
    %v2 = vld [vmem:[%s0] sm:$0xff]
    %vm3 = vcmask 523264
    %4 = vst.msk [vmem:[#allocation0] ss:$8 sm:$0xf] %vm3, %v2
    %5 = vst.msk [vmem:[#allocation0] ss:$8 sm:$0xf0] %vm3, %v2
    %s6 = scalar_lea.vmem %s0, 8
    %v7 = vld [vmem:[%s6] sm:$0xff]
    %vm8 = vcmask 523264
    %s9 = scalar_lea.vmem [#allocation0], 2
    %10 = vst.msk [vmem:[%s9] ss:$8 sm:$0xf] %vm8, %v7
    %s11 = scalar_lea.vmem [#allocation0], 2
    %12 = vst.msk [vmem:[%s11] ss:$8 sm:$0xf0] %vm8, %v7
    %s13 = scalar_lea.vmem %s0, 16
    %v14 = vld [vmem:[%s13] sm:$0xff]
    %vm15 = vcmask 523264
    %s16 = scalar_lea.vmem [#allocation0], 64
    %17 = vst.msk [vmem:[%s16] ss:$8 sm:$0xf] %vm15, %v14
    %s18 = scalar_lea.vmem [#allocation0], 64
    %19 = vst.msk [vmem:[%s18] ss:$8 sm:$0xf0] %vm15, %v14
    %s20 = scalar_lea.vmem %s0, 24
    %v21 = vld [vmem:[%s20] sm:$0xff]
    %vm22 = vcmask 523264
    %s23 = scalar_lea.vmem [#allocation0], 66
    %24 = vst.msk [vmem:[%s23] ss:$8 sm:$0xf] %vm22, %v21
    %s25 = scalar_lea.vmem [#allocation0], 66
    %26 = vst.msk [vmem:[%s25] ss:$8 sm:$0xf0] %vm22, %v21
    %s27 = scalar_lea.vmem %s0, 32
    %v28 = vld [vmem:[%s27] sm:$0xff]
    %vm29 = vcmask 523264
    %s30 = scalar_lea.vmem [#allocation0], 128
    %31 = vst.msk [vmem:[%s30] ss:$8 sm:$0xf] %vm29, %v28
    %s32 = scalar_lea.vmem [#allocation0], 128
    %33 = vst.msk [vmem:[%s32] ss:$8 sm:$0xf0] %vm29, %v28
    %s34 = scalar_lea.vmem %s0, 40
    %v35 = vld [vmem:[%s34] sm:$0xff]
    %vm36 = vcmask 523264
    %s37 = scalar_lea.vmem [#allocation0], 130
    %38 = vst.msk [vmem:[%s37] ss:$8 sm:$0xf] %vm36, %v35
    %s39 = scalar_lea.vmem [#allocation0], 130
    %40 = vst.msk [vmem:[%s39] ss:$8 sm:$0xf0] %vm36, %v35
    %s41 = scalar_lea.vmem %s0, 48
    %v42 = vld [vmem:[%s41] sm:$0xff]
    %vm43 = vcmask 523264
    %s44 = scalar_lea.vmem [#allocation0], 192
    %45 = vst.msk [vmem:[%s44] ss:$8 sm:$0xf] %vm43, %v42
    %s46 = scalar_lea.vmem [#allocation0], 192
    %47 = vst.msk [vmem:[%s46] ss:$8 sm:$0xf0] %vm43, %v42
    %s48 = scalar_lea.vmem %s0, 56
    %v49 = vld [vmem:[%s48] sm:$0xff]
    %vm50 = vcmask 523264
    %s51 = scalar_lea.vmem [#allocation0], 194
    %52 = vst.msk [vmem:[%s51] ss:$8 sm:$0xf] %vm50, %v49
    %s53 = scalar_lea.vmem [#allocation0], 194
    %54 = vst.msk [vmem:[%s53] ss:$8 sm:$0xf0] %vm50, %v49
    %s55 = scalar_lea.vmem %s0, 64
    %v56 = vld [vmem:[%s55] sm:$0xff]
    %vm57 = vcmask 523264
    %s58 = scalar_lea.vmem [#allocation0], 256
    %59 = vst.msk [vmem:[%s58] ss:$8 sm:$0xf] %vm57, %v56
    %s60 = scalar_lea.vmem [#allocation0], 256
    %61 = vst.msk [vmem:[%s60] ss:$8 sm:$0xf0] %vm57, %v56
    %s62 = scalar_lea.vmem %s0, 72
    %v63 = vld [vmem:[%s62] sm:$0xff]
    %vm64 = vcmask 523264
    %s65 = scalar_lea.vmem [#allocation0], 258
    %66 = vst.msk [vmem:[%s65] ss:$8 sm:$0xf] %vm64, %v63
    %s67 = scalar_lea.vmem [#allocation0], 258
    %68 = vst.msk [vmem:[%s67] ss:$8 sm:$0xf0] %vm64, %v63
    %s69 = scalar_lea.vmem %s0, 80
    %v70 = vld [vmem:[%s69] sm:$0xff]
    %vm71 = vcmask 523264
    %s72 = scalar_lea.vmem [#allocation0], 320
    %73 = vst.msk [vmem:[%s72] ss:$8 sm:$0xf] %vm71, %v70
    %s74 = scalar_lea.vmem [#allocation0], 320
    %75 = vst.msk [vmem:[%s74] ss:$8 sm:$0xf0] %vm71, %v70
    %s76 = scalar_lea.vmem %s0, 88
    %v77 = vld [vmem:[%s76] sm:$0xff]
    %vm78 = vcmask 523264
    %s79 = scalar_lea.vmem [#allocation0], 322
    %80 = vst.msk [vmem:[%s79] ss:$8 sm:$0xf] %vm78, %v77
    %s81 = scalar_lea.vmem [#allocation0], 322
    %82 = vst.msk [vmem:[%s81] ss:$8 sm:$0xf0] %vm78, %v77
    %s83 = scalar_lea.vmem %s0, 96
    %v84 = vld [vmem:[%s83] sm:$0xff]
    %vm85 = vcmask 523264
    %s86 = scalar_lea.vmem [#allocation0], 384
    %87 = vst.msk [vmem:[%s86] ss:$8 sm:$0xf] %vm85, %v84
    %s88 = scalar_lea.vmem [#allocation0], 384
    %89 = vst.msk [vmem:[%s88] ss:$8 sm:$0xf0] %vm85, %v84
    %s90 = scalar_lea.vmem %s0, 104
    %v91 = vld [vmem:[%s90] sm:$0xff]
    %vm92 = vcmask 523264
    %s93 = scalar_lea.vmem [#allocation0], 386
    %94 = vst.msk [vmem:[%s93] ss:$8 sm:$0xf] %vm92, %v91
    %s95 = scalar_lea.vmem [#allocation0], 386
    %96 = vst.msk [vmem:[%s95] ss:$8 sm:$0xf0] %vm92, %v91
    %s97 = scalar_lea.vmem %s0, 112
    %v98 = vld [vmem:[%s97] sm:$0xff]
    %vm99 = vcmask 523264
    %s100 = scalar_lea.vmem [#allocation0], 448
    %101 = vst.msk [vmem:[%s100] ss:$8 sm:$0xf] %vm99, %v98
    %s102 = scalar_lea.vmem [#allocation0], 448
    %103 = vst.msk [vmem:[%s102] ss:$8 sm:$0xf0] %vm99, %v98
    %s104 = scalar_lea.vmem %s0, 120
    %v105 = vld [vmem:[%s104] sm:$0xff]
    %vm106 = vcmask 523264
    %s107 = scalar_lea.vmem [#allocation0], 450
    %108 = vst.msk [vmem:[%s107] ss:$8 sm:$0xf] %vm106, %v105
    %s109 = scalar_lea.vmem [#allocation0], 450
    %110 = vst.msk [vmem:[%s109] ss:$8 sm:$0xf0] %vm106, %v105
    %v111 = vld.sshfl [vmem:[%s0] sm:$0xff pattern:$0xb3a29180]
    %112 = vrot.lane.b32.xlu0 %v111, 64
    %v113 = vpop.permute.xlu0 %112
    %vm114 = vcmask 523264
    %s115 = scalar_lea.vmem [#allocation0], 1
    %116 = vst.msk [vmem:[%s115] ss:$2 sm:$0x3] %vm114, %v113
    %s117 = scalar_lea.vmem [#allocation0], 5
    %118 = vst.msk [vmem:[%s117] ss:$2 sm:$0xc] %vm114, %v113
    %s119 = scalar_lea.vmem [#allocation0], 9
    %120 = vst.msk [vmem:[%s119] ss:$2 sm:$0x30] %vm114, %v113
    %s121 = scalar_lea.vmem [#allocation0], 13
    %122 = vst.msk [vmem:[%s121] ss:$2 sm:$0xc0] %vm114, %v113
    %s123 = scalar_lea.vmem %s0, 4
    %v124 = vld.sshfl [vmem:[%s123] sm:$0xff pattern:$0xb3a29180]
    %125 = vrot.lane.b32.xlu0 %v124, 64
    %v126 = vpop.permute.xlu0 %125
    %vm127 = vcmask 523264
    %s128 = scalar_lea.vmem [#allocation0], 33
    %129 = vst.msk [vmem:[%s128] ss:$2 sm:$0x3] %vm127, %v126
    %s130 = scalar_lea.vmem [#allocation0], 37
    %131 = vst.msk [vmem:[%s130] ss:$2 sm:$0xc] %vm127, %v126
    %s132 = scalar_lea.vmem [#allocation0], 41
    %133 = vst.msk [vmem:[%s132] ss:$2 sm:$0x30] %vm127, %v126
    %s134 = scalar_lea.vmem [#allocation0], 45
    %135 = vst.msk [vmem:[%s134] ss:$2 sm:$0xc0] %vm127, %v126
    %s136 = scalar_lea.vmem %s0, 16
    %v137 = vld.sshfl [vmem:[%s136] sm:$0xff pattern:$0xb3a29180]
    %138 = vrot.lane.b32.xlu0 %v137, 64
    %v139 = vpop.permute.xlu0 %138
    %vm140 = vcmask 523264
    %s141 = scalar_lea.vmem [#allocation0], 65
    %142 = vst.msk [vmem:[%s141] ss:$2 sm:$0x3] %vm140, %v139
    %s143 = scalar_lea.vmem [#allocation0], 69
    %144 = vst.msk [vmem:[%s143] ss:$2 sm:$0xc] %vm140, %v139
    %s145 = scalar_lea.vmem [#allocation0], 73
    %146 = vst.msk [vmem:[%s145] ss:$2 sm:$0x30] %vm140, %v139
    %s147 = scalar_lea.vmem [#allocation0], 77
    %148 = vst.msk [vmem:[%s147] ss:$2 sm:$0xc0] %vm140, %v139
    %s149 = scalar_lea.vmem %s0, 20
    %v150 = vld.sshfl [vmem:[%s149] sm:$0xff pattern:$0xb3a29180]
    %151 = vrot.lane.b32.xlu0 %v150, 64
    %v152 = vpop.permute.xlu0 %151
    %vm153 = vcmask 523264
    %s154 = scalar_lea.vmem [#allocation0], 97
    %155 = vst.msk [vmem:[%s154] ss:$2 sm:$0x3] %vm153, %v152
    %s156 = scalar_lea.vmem [#allocation0], 101
    %157 = vst.msk [vmem:[%s156] ss:$2 sm:$0xc] %vm153, %v152
    %s158 = scalar_lea.vmem [#allocation0], 105
    %159 = vst.msk [vmem:[%s158] ss:$2 sm:$0x30] %vm153, %v152
    %s160 = scalar_lea.vmem [#allocation0], 109
    %161 = vst.msk [vmem:[%s160] ss:$2 sm:$0xc0] %vm153, %v152
    %s162 = scalar_lea.vmem %s0, 32
    %v163 = vld.sshfl [vmem:[%s162] sm:$0xff pattern:$0xb3a29180]
    %164 = vrot.lane.b32.xlu0 %v163, 64
    %v165 = vpop.permute.xlu0 %164
    %vm166 = vcmask 523264
    %s167 = scalar_lea.vmem [#allocation0], 129
    %168 = vst.msk [vmem:[%s167] ss:$2 sm:$0x3] %vm166, %v165
    %s169 = scalar_lea.vmem [#allocation0], 133
    %170 = vst.msk [vmem:[%s169] ss:$2 sm:$0xc] %vm166, %v165
    %s171 = scalar_lea.vmem [#allocation0], 137
    %172 = vst.msk [vmem:[%s171] ss:$2 sm:$0x30] %vm166, %v165
    %s173 = scalar_lea.vmem [#allocation0], 141
    %174 = vst.msk [vmem:[%s173] ss:$2 sm:$0xc0] %vm166, %v165
    %s175 = scalar_lea.vmem %s0, 36
    %v176 = vld.sshfl [vmem:[%s175] sm:$0xff pattern:$0xb3a29180]
    %177 = vrot.lane.b32.xlu0 %v176, 64
    %v178 = vpop.permute.xlu0 %177
    %vm179 = vcmask 523264
    %s180 = scalar_lea.vmem [#allocation0], 161
    %181 = vst.msk [vmem:[%s180] ss:$2 sm:$0x3] %vm179, %v178
    %s182 = scalar_lea.vmem [#allocation0], 165
    %183 = vst.msk [vmem:[%s182] ss:$2 sm:$0xc] %vm179, %v178
    %s184 = scalar_lea.vmem [#allocation0], 169
    %185 = vst.msk [vmem:[%s184] ss:$2 sm:$0x30] %vm179, %v178
    %s186 = scalar_lea.vmem [#allocation0], 173
    %187 = vst.msk [vmem:[%s186] ss:$2 sm:$0xc0] %vm179, %v178
    %s188 = scalar_lea.vmem %s0, 48
    %v189 = vld.sshfl [vmem:[%s188] sm:$0xff pattern:$0xb3a29180]
    %190 = vrot.lane.b32.xlu0 %v189, 64
    %v191 = vpop.permute.xlu0 %190
    %vm192 = vcmask 523264
    %s193 = scalar_lea.vmem [#allocation0], 193
    %194 = vst.msk [vmem:[%s193] ss:$2 sm:$0x3] %vm192, %v191
    %s195 = scalar_lea.vmem [#allocation0], 197
    %196 = vst.msk [vmem:[%s195] ss:$2 sm:$0xc] %vm192, %v191
    %s197 = scalar_lea.vmem [#allocation0], 201
    %198 = vst.msk [vmem:[%s197] ss:$2 sm:$0x30] %vm192, %v191
    %s199 = scalar_lea.vmem [#allocation0], 205
    %200 = vst.msk [vmem:[%s199] ss:$2 sm:$0xc0] %vm192, %v191
    %s201 = scalar_lea.vmem %s0, 52
    %v202 = vld.sshfl [vmem:[%s201] sm:$0xff pattern:$0xb3a29180]
    %203 = vrot.lane.b32.xlu0 %v202, 64
    %v204 = vpop.permute.xlu0 %203
    %vm205 = vcmask 523264
    %s206 = scalar_lea.vmem [#allocation0], 225
    %207 = vst.msk [vmem:[%s206] ss:$2 sm:$0x3] %vm205, %v204
    %s208 = scalar_lea.vmem [#allocation0], 229
    %209 = vst.msk [vmem:[%s208] ss:$2 sm:$0xc] %vm205, %v204
    %s210 = scalar_lea.vmem [#allocation0], 233
    %211 = vst.msk [vmem:[%s210] ss:$2 sm:$0x30] %vm205, %v204
    %s212 = scalar_lea.vmem [#allocation0], 237
    %213 = vst.msk [vmem:[%s212] ss:$2 sm:$0xc0] %vm205, %v204
    %s214 = scalar_lea.vmem %s0, 64
    %v215 = vld.sshfl [vmem:[%s214] sm:$0xff pattern:$0xb3a29180]
    %216 = vrot.lane.b32.xlu0 %v215, 64
    %v217 = vpop.permute.xlu0 %216
    %vm218 = vcmask 523264
    %s219 = scalar_lea.vmem [#allocation0], 257
    %220 = vst.msk [vmem:[%s219] ss:$2 sm:$0x3] %vm218, %v217
    %s221 = scalar_lea.vmem [#allocation0], 261
    %222 = vst.msk [vmem:[%s221] ss:$2 sm:$0xc] %vm218, %v217
    %s223 = scalar_lea.vmem [#allocation0], 265
    %224 = vst.msk [vmem:[%s223] ss:$2 sm:$0x30] %vm218, %v217
    %s225 = scalar_lea.vmem [#allocation0], 269
    %226 = vst.msk [vmem:[%s225] ss:$2 sm:$0xc0] %vm218, %v217
    %s227 = scalar_lea.vmem %s0, 68
    %v228 = vld.sshfl [vmem:[%s227] sm:$0xff pattern:$0xb3a29180]
    %229 = vrot.lane.b32.xlu0 %v228, 64
    %v230 = vpop.permute.xlu0 %229
    %vm231 = vcmask 523264
    %s232 = scalar_lea.vmem [#allocation0], 289
    %233 = vst.msk [vmem:[%s232] ss:$2 sm:$0x3] %vm231, %v230
    %s234 = scalar_lea.vmem [#allocation0], 293
    %235 = vst.msk [vmem:[%s234] ss:$2 sm:$0xc] %vm231, %v230
    %s236 = scalar_lea.vmem [#allocation0], 297
    %237 = vst.msk [vmem:[%s236] ss:$2 sm:$0x30] %vm231, %v230
    %s238 = scalar_lea.vmem [#allocation0], 301
    %239 = vst.msk [vmem:[%s238] ss:$2 sm:$0xc0] %vm231, %v230
    %s240 = scalar_lea.vmem %s0, 80
    %v241 = vld.sshfl [vmem:[%s240] sm:$0xff pattern:$0xb3a29180]
    %242 = vrot.lane.b32.xlu0 %v241, 64
    %v243 = vpop.permute.xlu0 %242
    %vm244 = vcmask 523264
    %s245 = scalar_lea.vmem [#allocation0], 321
    %246 = vst.msk [vmem:[%s245] ss:$2 sm:$0x3] %vm244, %v243
    %s247 = scalar_lea.vmem [#allocation0], 325
    %248 = vst.msk [vmem:[%s247] ss:$2 sm:$0xc] %vm244, %v243
    %s249 = scalar_lea.vmem [#allocation0], 329
    %250 = vst.msk [vmem:[%s249] ss:$2 sm:$0x30] %vm244, %v243
    %s251 = scalar_lea.vmem [#allocation0], 333
    %252 = vst.msk [vmem:[%s251] ss:$2 sm:$0xc0] %vm244, %v243
    %s253 = scalar_lea.vmem %s0, 84
    %v254 = vld.sshfl [vmem:[%s253] sm:$0xff pattern:$0xb3a29180]
    %255 = vrot.lane.b32.xlu0 %v254, 64
    %v256 = vpop.permute.xlu0 %255
    %vm257 = vcmask 523264
    %s258 = scalar_lea.vmem [#allocation0], 353
    %259 = vst.msk [vmem:[%s258] ss:$2 sm:$0x3] %vm257, %v256
    %s260 = scalar_lea.vmem [#allocation0], 357
    %261 = vst.msk [vmem:[%s260] ss:$2 sm:$0xc] %vm257, %v256
    %s262 = scalar_lea.vmem [#allocation0], 361
    %263 = vst.msk [vmem:[%s262] ss:$2 sm:$0x30] %vm257, %v256
    %s264 = scalar_lea.vmem [#allocation0], 365
    %265 = vst.msk [vmem:[%s264] ss:$2 sm:$0xc0] %vm257, %v256
    %s266 = scalar_lea.vmem %s0, 96
    %v267 = vld.sshfl [vmem:[%s266] sm:$0xff pattern:$0xb3a29180]
    %268 = vrot.lane.b32.xlu0 %v267, 64
    %v269 = vpop.permute.xlu0 %268
    %vm270 = vcmask 523264
    %s271 = scalar_lea.vmem [#allocation0], 385
    %272 = vst.msk [vmem:[%s271] ss:$2 sm:$0x3] %vm270, %v269
    %s273 = scalar_lea.vmem [#allocation0], 389
    %274 = vst.msk [vmem:[%s273] ss:$2 sm:$0xc] %vm270, %v269
    %s275 = scalar_lea.vmem [#allocation0], 393
    %276 = vst.msk [vmem:[%s275] ss:$2 sm:$0x30] %vm270, %v269
    %s277 = scalar_lea.vmem [#allocation0], 397
    %278 = vst.msk [vmem:[%s277] ss:$2 sm:$0xc0] %vm270, %v269
    %s279 = scalar_lea.vmem %s0, 100
    %v280 = vld.sshfl [vmem:[%s279] sm:$0xff pattern:$0xb3a29180]
    %281 = vrot.lane.b32.xlu0 %v280, 64
    %v282 = vpop.permute.xlu0 %281
    %vm283 = vcmask 523264
    %s284 = scalar_lea.vmem [#allocation0], 417
    %285 = vst.msk [vmem:[%s284] ss:$2 sm:$0x3] %vm283, %v282
    %s286 = scalar_lea.vmem [#allocation0], 421
    %287 = vst.msk [vmem:[%s286] ss:$2 sm:$0xc] %vm283, %v282
    %s288 = scalar_lea.vmem [#allocation0], 425
    %289 = vst.msk [vmem:[%s288] ss:$2 sm:$0x30] %vm283, %v282
    %s290 = scalar_lea.vmem [#allocation0], 429
    %291 = vst.msk [vmem:[%s290] ss:$2 sm:$0xc0] %vm283, %v282
    %s292 = scalar_lea.vmem %s0, 112
    %v293 = vld.sshfl [vmem:[%s292] sm:$0xff pattern:$0xb3a29180]
    %294 = vrot.lane.b32.xlu0 %v293, 64
    %v295 = vpop.permute.xlu0 %294
    %vm296 = vcmask 523264
    %s297 = scalar_lea.vmem [#allocation0], 449
    %298 = vst.msk [vmem:[%s297] ss:$2 sm:$0x3] %vm296, %v295
    %s299 = scalar_lea.vmem [#allocation0], 453
    %300 = vst.msk [vmem:[%s299] ss:$2 sm:$0xc] %vm296, %v295
    %s301 = scalar_lea.vmem [#allocation0], 457
    %302 = vst.msk [vmem:[%s301] ss:$2 sm:$0x30] %vm296, %v295
    %s303 = scalar_lea.vmem [#allocation0], 461
    %304 = vst.msk [vmem:[%s303] ss:$2 sm:$0xc0] %vm296, %v295
    %s305 = scalar_lea.vmem %s0, 116
    %v306 = vld.sshfl [vmem:[%s305] sm:$0xff pattern:$0xb3a29180]
    %307 = vrot.lane.b32.xlu0 %v306, 64
    %v308 = vpop.permute.xlu0 %307
    %vm309 = vcmask 523264
    %s310 = scalar_lea.vmem [#allocation0], 481
    %311 = vst.msk [vmem:[%s310] ss:$2 sm:$0x3] %vm309, %v308
    %s312 = scalar_lea.vmem [#allocation0], 485
    %313 = vst.msk [vmem:[%s312] ss:$2 sm:$0xc] %vm309, %v308
    %s314 = scalar_lea.vmem [#allocation0], 489
    %315 = vst.msk [vmem:[%s314] ss:$2 sm:$0x30] %vm309, %v308
    %s316 = scalar_lea.vmem [#allocation0], 493
    %317 = vst.msk [vmem:[%s316] ss:$2 sm:$0xc0] %vm309, %v308
    %s319 = ssub.s32 16, 1
    %v320 = vld [vmem:[#allocation0] sm:%s319]
    %s322 = ssub.s32 16, 1
    %323 = vst [vmem:[%s1] sm:%s322] %v320
    %s324 = scalar_lea.vmem [#allocation0], 8
    %v325 = vld [vmem:[%s324] sm:%s319]
    %s327 = ssub.s32 16, 1
    %s328 = scalar_lea.vmem %s1, 4
    %329 = vst [vmem:[%s328] sm:%s327] %v325
    %s330 = scalar_lea.vmem [#allocation0], 16
    %v331 = vld [vmem:[%s330] sm:%s319]
    %s333 = ssub.s32 16, 1
    %s334 = scalar_lea.vmem %s1, 8
    %335 = vst [vmem:[%s334] sm:%s333] %v331
    %s336 = scalar_lea.vmem [#allocation0], 24
    %v337 = vld [vmem:[%s336] sm:%s319]
    %s339 = ssub.s32 16, 1
    %s340 = scalar_lea.vmem %s1, 12
    %341 = vst [vmem:[%s340] sm:%s339] %v337
    %s342 = scalar_lea.vmem [#allocation0], 32
    %v343 = vld [vmem:[%s342] sm:%s319]
    %s345 = ssub.s32 16, 1
    %s346 = scalar_lea.vmem %s1, 16
    %347 = vst [vmem:[%s346] sm:%s345] %v343
    %s348 = scalar_lea.vmem [#allocation0], 40
    %v349 = vld [vmem:[%s348] sm:%s319]
    %s351 = ssub.s32 16, 1
    %s352 = scalar_lea.vmem %s1, 20
    %353 = vst [vmem:[%s352] sm:%s351] %v349
    %s354 = scalar_lea.vmem [#allocation0], 48
    %v355 = vld [vmem:[%s354] sm:%s319]
    %s357 = ssub.s32 16, 1
    %s358 = scalar_lea.vmem %s1, 24
    %359 = vst [vmem:[%s358] sm:%s357] %v355
    %s360 = scalar_lea.vmem [#allocation0], 56
    %v361 = vld [vmem:[%s360] sm:%s319]
    %s363 = ssub.s32 16, 1
    %s364 = scalar_lea.vmem %s1, 28
    %365 = vst [vmem:[%s364] sm:%s363] %v361
    %s366 = scalar_lea.vmem [#allocation0], 64
    %v367 = vld [vmem:[%s366] sm:%s319]
    %s369 = ssub.s32 16, 1
    %s370 = scalar_lea.vmem %s1, 32
    %371 = vst [vmem:[%s370] sm:%s369] %v367
    %s372 = scalar_lea.vmem [#allocation0], 72
    %v373 = vld [vmem:[%s372] sm:%s319]
    %s375 = ssub.s32 16, 1
    %s376 = scalar_lea.vmem %s1, 36
    %377 = vst [vmem:[%s376] sm:%s375] %v373
    %s378 = scalar_lea.vmem [#allocation0], 80
    %v379 = vld [vmem:[%s378] sm:%s319]
    %s381 = ssub.s32 16, 1
    %s382 = scalar_lea.vmem %s1, 40
    %383 = vst [vmem:[%s382] sm:%s381] %v379
    %s384 = scalar_lea.vmem [#allocation0], 88
    %v385 = vld [vmem:[%s384] sm:%s319]
    %s387 = ssub.s32 16, 1
    %s388 = scalar_lea.vmem %s1, 44
    %389 = vst [vmem:[%s388] sm:%s387] %v385
    %s390 = scalar_lea.vmem [#allocation0], 96
    %v391 = vld [vmem:[%s390] sm:%s319]
    %s393 = ssub.s32 16, 1
    %s394 = scalar_lea.vmem %s1, 48
    %395 = vst [vmem:[%s394] sm:%s393] %v391
    %s396 = scalar_lea.vmem [#allocation0], 104
    %v397 = vld [vmem:[%s396] sm:%s319]
    %s399 = ssub.s32 16, 1
    %s400 = scalar_lea.vmem %s1, 52
    %401 = vst [vmem:[%s400] sm:%s399] %v397
    %s402 = scalar_lea.vmem [#allocation0], 112
    %v403 = vld [vmem:[%s402] sm:%s319]
    %s405 = ssub.s32 16, 1
    %s406 = scalar_lea.vmem %s1, 56
    %407 = vst [vmem:[%s406] sm:%s405] %v403
    %s408 = scalar_lea.vmem [#allocation0], 120
    %v409 = vld [vmem:[%s408] sm:%s319]
    %s411 = ssub.s32 16, 1
    %s412 = scalar_lea.vmem %s1, 60
    %413 = vst [vmem:[%s412] sm:%s411] %v409
    %s414 = scalar_lea.vmem [#allocation0], 128
    %v415 = vld [vmem:[%s414] sm:%s319]
    %s417 = ssub.s32 16, 1
    %s418 = scalar_lea.vmem %s1, 64
    %419 = vst [vmem:[%s418] sm:%s417] %v415
    %s420 = scalar_lea.vmem [#allocation0], 136
    %v421 = vld [vmem:[%s420] sm:%s319]
    %s423 = ssub.s32 16, 1
    %s424 = scalar_lea.vmem %s1, 68
    %425 = vst [vmem:[%s424] sm:%s423] %v421
    %s426 = scalar_lea.vmem [#allocation0], 144
    %v427 = vld [vmem:[%s426] sm:%s319]
    %s429 = ssub.s32 16, 1
    %s430 = scalar_lea.vmem %s1, 72
    %431 = vst [vmem:[%s430] sm:%s429] %v427
    %s432 = scalar_lea.vmem [#allocation0], 152
    %v433 = vld [vmem:[%s432] sm:%s319]
    %s435 = ssub.s32 16, 1
    %s436 = scalar_lea.vmem %s1, 76
    %437 = vst [vmem:[%s436] sm:%s435] %v433
    %s438 = scalar_lea.vmem [#allocation0], 160
    %v439 = vld [vmem:[%s438] sm:%s319]
    %s441 = ssub.s32 16, 1
    %s442 = scalar_lea.vmem %s1, 80
    %443 = vst [vmem:[%s442] sm:%s441] %v439
    %s444 = scalar_lea.vmem [#allocation0], 168
    %v445 = vld [vmem:[%s444] sm:%s319]
    %s447 = ssub.s32 16, 1
    %s448 = scalar_lea.vmem %s1, 84
    %449 = vst [vmem:[%s448] sm:%s447] %v445
    %s450 = scalar_lea.vmem [#allocation0], 176
    %v451 = vld [vmem:[%s450] sm:%s319]
    %s453 = ssub.s32 16, 1
    %s454 = scalar_lea.vmem %s1, 88
    %455 = vst [vmem:[%s454] sm:%s453] %v451
    %s456 = scalar_lea.vmem [#allocation0], 184
    %v457 = vld [vmem:[%s456] sm:%s319]
    %s459 = ssub.s32 16, 1
    %s460 = scalar_lea.vmem %s1, 92
    %461 = vst [vmem:[%s460] sm:%s459] %v457
    %s462 = scalar_lea.vmem [#allocation0], 192
    %v463 = vld [vmem:[%s462] sm:%s319]
    %s465 = ssub.s32 16, 1
    %s466 = scalar_lea.vmem %s1, 96
    %467 = vst [vmem:[%s466] sm:%s465] %v463
    %s468 = scalar_lea.vmem [#allocation0], 200
    %v469 = vld [vmem:[%s468] sm:%s319]
    %s471 = ssub.s32 16, 1
    %s472 = scalar_lea.vmem %s1, 100
    %473 = vst [vmem:[%s472] sm:%s471] %v469
    %s474 = scalar_lea.vmem [#allocation0], 208
    %v475 = vld [vmem:[%s474] sm:%s319]
    %s477 = ssub.s32 16, 1
    %s478 = scalar_lea.vmem %s1, 104
    %479 = vst [vmem:[%s478] sm:%s477] %v475
    %s480 = scalar_lea.vmem [#allocation0], 216
    %v481 = vld [vmem:[%s480] sm:%s319]
    %s483 = ssub.s32 16, 1
    %s484 = scalar_lea.vmem %s1, 108
    %485 = vst [vmem:[%s484] sm:%s483] %v481
    %s486 = scalar_lea.vmem [#allocation0], 224
    %v487 = vld [vmem:[%s486] sm:%s319]
    %s489 = ssub.s32 16, 1
    %s490 = scalar_lea.vmem %s1, 112
    %491 = vst [vmem:[%s490] sm:%s489] %v487
    %s492 = scalar_lea.vmem [#allocation0], 232
    %v493 = vld [vmem:[%s492] sm:%s319]
    %s495 = ssub.s32 16, 1
    %s496 = scalar_lea.vmem %s1, 116
    %497 = vst [vmem:[%s496] sm:%s495] %v493
    %s498 = scalar_lea.vmem [#allocation0], 240
    %v499 = vld [vmem:[%s498] sm:%s319]
    %s501 = ssub.s32 16, 1
    %s502 = scalar_lea.vmem %s1, 120
    %503 = vst [vmem:[%s502] sm:%s501] %v499
    %s504 = scalar_lea.vmem [#allocation0], 248
    %v505 = vld [vmem:[%s504] sm:%s319]
    %s507 = ssub.s32 16, 1
    %s508 = scalar_lea.vmem %s1, 124
    %509 = vst [vmem:[%s508] sm:%s507] %v505
    %s510 = scalar_lea.vmem [#allocation0], 256
    %v511 = vld [vmem:[%s510] sm:%s319]
    %s513 = ssub.s32 16, 1
    %s514 = scalar_lea.vmem %s1, 128
    %515 = vst [vmem:[%s514] sm:%s513] %v511
    %s516 = scalar_lea.vmem [#allocation0], 264
    %v517 = vld [vmem:[%s516] sm:%s319]
    %s519 = ssub.s32 16, 1
    %s520 = scalar_lea.vmem %s1, 132
    %521 = vst [vmem:[%s520] sm:%s519] %v517
    %s522 = scalar_lea.vmem [#allocation0], 272
    %v523 = vld [vmem:[%s522] sm:%s319]
    %s525 = ssub.s32 16, 1
    %s526 = scalar_lea.vmem %s1, 136
    %527 = vst [vmem:[%s526] sm:%s525] %v523
    %s528 = scalar_lea.vmem [#allocation0], 280
    %v529 = vld [vmem:[%s528] sm:%s319]
    %s531 = ssub.s32 16, 1
    %s532 = scalar_lea.vmem %s1, 140
    %533 = vst [vmem:[%s532] sm:%s531] %v529
    %s534 = scalar_lea.vmem [#allocation0], 288
    %v535 = vld [vmem:[%s534] sm:%s319]
    %s537 = ssub.s32 16, 1
    %s538 = scalar_lea.vmem %s1, 144
    %539 = vst [vmem:[%s538] sm:%s537] %v535
    %s540 = scalar_lea.vmem [#allocation0], 296
    %v541 = vld [vmem:[%s540] sm:%s319]
    %s543 = ssub.s32 16, 1
    %s544 = scalar_lea.vmem %s1, 148
    %545 = vst [vmem:[%s544] sm:%s543] %v541
    %s546 = scalar_lea.vmem [#allocation0], 304
    %v547 = vld [vmem:[%s546] sm:%s319]
    %s549 = ssub.s32 16, 1
    %s550 = scalar_lea.vmem %s1, 152
    %551 = vst [vmem:[%s550] sm:%s549] %v547
    %s552 = scalar_lea.vmem [#allocation0], 312
    %v553 = vld [vmem:[%s552] sm:%s319]
    %s555 = ssub.s32 16, 1
    %s556 = scalar_lea.vmem %s1, 156
    %557 = vst [vmem:[%s556] sm:%s555] %v553
    %s558 = scalar_lea.vmem [#allocation0], 320
    %v559 = vld [vmem:[%s558] sm:%s319]
    %s561 = ssub.s32 16, 1
    %s562 = scalar_lea.vmem %s1, 160
    %563 = vst [vmem:[%s562] sm:%s561] %v559
    %s564 = scalar_lea.vmem [#allocation0], 328
    %v565 = vld [vmem:[%s564] sm:%s319]
    %s567 = ssub.s32 16, 1
    %s568 = scalar_lea.vmem %s1, 164
    %569 = vst [vmem:[%s568] sm:%s567] %v565
    %s570 = scalar_lea.vmem [#allocation0], 336
    %v571 = vld [vmem:[%s570] sm:%s319]
    %s573 = ssub.s32 16, 1
    %s574 = scalar_lea.vmem %s1, 168
    %575 = vst [vmem:[%s574] sm:%s573] %v571
    %s576 = scalar_lea.vmem [#allocation0], 344
    %v577 = vld [vmem:[%s576] sm:%s319]
    %s579 = ssub.s32 16, 1
    %s580 = scalar_lea.vmem %s1, 172
    %581 = vst [vmem:[%s580] sm:%s579] %v577
    %s582 = scalar_lea.vmem [#allocation0], 352
    %v583 = vld [vmem:[%s582] sm:%s319]
    %s585 = ssub.s32 16, 1
    %s586 = scalar_lea.vmem %s1, 176
    %587 = vst [vmem:[%s586] sm:%s585] %v583
    %s588 = scalar_lea.vmem [#allocation0], 360
    %v589 = vld [vmem:[%s588] sm:%s319]
    %s591 = ssub.s32 16, 1
    %s592 = scalar_lea.vmem %s1, 180
    %593 = vst [vmem:[%s592] sm:%s591] %v589
    %s594 = scalar_lea.vmem [#allocation0], 368
    %v595 = vld [vmem:[%s594] sm:%s319]
    %s597 = ssub.s32 16, 1
    %s598 = scalar_lea.vmem %s1, 184
    %599 = vst [vmem:[%s598] sm:%s597] %v595
    %s600 = scalar_lea.vmem [#allocation0], 376
    %v601 = vld [vmem:[%s600] sm:%s319]
    %s603 = ssub.s32 16, 1
    %s604 = scalar_lea.vmem %s1, 188
    %605 = vst [vmem:[%s604] sm:%s603] %v601
    %s606 = scalar_lea.vmem [#allocation0], 384
    %v607 = vld [vmem:[%s606] sm:%s319]
    %s609 = ssub.s32 16, 1
    %s610 = scalar_lea.vmem %s1, 192
    %611 = vst [vmem:[%s610] sm:%s609] %v607
    %s612 = scalar_lea.vmem [#allocation0], 392
    %v613 = vld [vmem:[%s612] sm:%s319]
    %s615 = ssub.s32 16, 1
    %s616 = scalar_lea.vmem %s1, 196
    %617 = vst [vmem:[%s616] sm:%s615] %v613
    %s618 = scalar_lea.vmem [#allocation0], 400
    %v619 = vld [vmem:[%s618] sm:%s319]
    %s621 = ssub.s32 16, 1
    %s622 = scalar_lea.vmem %s1, 200
    %623 = vst [vmem:[%s622] sm:%s621] %v619
    %s624 = scalar_lea.vmem [#allocation0], 408
    %v625 = vld [vmem:[%s624] sm:%s319]
    %s627 = ssub.s32 16, 1
    %s628 = scalar_lea.vmem %s1, 204
    %629 = vst [vmem:[%s628] sm:%s627] %v625
    %s630 = scalar_lea.vmem [#allocation0], 416
    %v631 = vld [vmem:[%s630] sm:%s319]
    %s633 = ssub.s32 16, 1
    %s634 = scalar_lea.vmem %s1, 208
    %635 = vst [vmem:[%s634] sm:%s633] %v631
    %s636 = scalar_lea.vmem [#allocation0], 424
    %v637 = vld [vmem:[%s636] sm:%s319]
    %s639 = ssub.s32 16, 1
    %s640 = scalar_lea.vmem %s1, 212
    %641 = vst [vmem:[%s640] sm:%s639] %v637
    %s642 = scalar_lea.vmem [#allocation0], 432
    %v643 = vld [vmem:[%s642] sm:%s319]
    %s645 = ssub.s32 16, 1
    %s646 = scalar_lea.vmem %s1, 216
    %647 = vst [vmem:[%s646] sm:%s645] %v643
    %s648 = scalar_lea.vmem [#allocation0], 440
    %v649 = vld [vmem:[%s648] sm:%s319]
    %s651 = ssub.s32 16, 1
    %s652 = scalar_lea.vmem %s1, 220
    %653 = vst [vmem:[%s652] sm:%s651] %v649
    %s654 = scalar_lea.vmem [#allocation0], 448
    %v655 = vld [vmem:[%s654] sm:%s319]
    %s657 = ssub.s32 16, 1
    %s658 = scalar_lea.vmem %s1, 224
    %659 = vst [vmem:[%s658] sm:%s657] %v655
    %s660 = scalar_lea.vmem [#allocation0], 456
    %v661 = vld [vmem:[%s660] sm:%s319]
    %s663 = ssub.s32 16, 1
    %s664 = scalar_lea.vmem %s1, 228
    %665 = vst [vmem:[%s664] sm:%s663] %v661
    %s666 = scalar_lea.vmem [#allocation0], 464
    %v667 = vld [vmem:[%s666] sm:%s319]
    %s669 = ssub.s32 16, 1
    %s670 = scalar_lea.vmem %s1, 232
    %671 = vst [vmem:[%s670] sm:%s669] %v667
    %s672 = scalar_lea.vmem [#allocation0], 472
    %v673 = vld [vmem:[%s672] sm:%s319]
    %s675 = ssub.s32 16, 1
    %s676 = scalar_lea.vmem %s1, 236
    %677 = vst [vmem:[%s676] sm:%s675] %v673
    %s678 = scalar_lea.vmem [#allocation0], 480
    %v679 = vld [vmem:[%s678] sm:%s319]
    %s681 = ssub.s32 16, 1
    %s682 = scalar_lea.vmem %s1, 240
    %683 = vst [vmem:[%s682] sm:%s681] %v679
    %s684 = scalar_lea.vmem [#allocation0], 488
    %v685 = vld [vmem:[%s684] sm:%s319]
    %s687 = ssub.s32 16, 1
    %s688 = scalar_lea.vmem %s1, 244
    %689 = vst [vmem:[%s688] sm:%s687] %v685
    %s690 = scalar_lea.vmem [#allocation0], 496
    %v691 = vld [vmem:[%s690] sm:%s319]
    %s693 = ssub.s32 16, 1
    %s694 = scalar_lea.vmem %s1, 248
    %695 = vst [vmem:[%s694] sm:%s693] %v691
    %s696 = scalar_lea.vmem [#allocation0], 504
    %v697 = vld [vmem:[%s696] sm:%s319]
    %s699 = ssub.s32 16, 1
    %s700 = scalar_lea.vmem %s1, 252
    %701 = vst [vmem:[%s700] sm:%s699] %v697

// kernel: rwkv6_feed_forward.1
$region0: #{rwkv6_feed_forward.1}
  #allocation0 [shape = 'u32[]', space=smem, size = 0x4, offset = 0x4, fixed_abs, tag = 'smem constant byte address 0x4 - core index']
  #allocation1 [shape = 'u32[72,128]{1,0:T(1,128)}', space=vmem, size = 0x9000, scoped, tag = 'internal scratch']
  #allocation2 [shape = 'f32[64,64]{1,0:T(8,128)}', space=vmem, size = 0x8000, scoped, tag = 'scratch operand']
  #allocation3 [shape = 'f32[64,64]{1,0:T(8,128)}', space=vmem, size = 0x8000, scoped, tag = 'scratch operand']
  #allocation4 [shape = 'f32[64,64]{1,0:T(8,128)}', space=vmem, size = 0x8000, scoped, tag = 'scratch operand']
  %s0 = inlined_call_operand.vmem [shape: f32[256,64], index: 0, kind: input, shape index: {}]
  %s1 = inlined_call_operand.vmem [shape: f32[4,1,64], index: 1, kind: input, shape index: {}]
  %s2 = inlined_call_operand.vmem [shape: f32[4,64], index: 2, kind: input, shape index: {}]
  %s3 = inlined_call_operand.vmem [shape: f32[64,256], index: 3, kind: input, shape index: {}]
  %s4 = inlined_call_operand.vmem [shape: f32[256,64], index: 4, kind: input, shape index: {}]
  %s5 = inlined_call_operand.vmem [shape: f32[64,64], index: 5, kind: input, shape index: {}]
  %s6 = inlined_call_operand.vmem [shape: f32[256,64], index: 6, kind: output, shape index: {}]
  %s7 = sld [smem:[#allocation0]]
  $region111: #{rwkv6_feed_forward.1} parent=0
    _
  %s9 = ssub.s32 1, %s7
  %s10 = scalar_select 0, %s9, %s7
  $region1: #{rwkv6_feed_forward.1} parent=0
    #allocation5 [shape = 'u8[65536]{0}', space=vmem, size = 0x10000, scoped, tag = 'input window, operand 3']
    loop: start=0, step=1, limit=10
    $region2: #{rwkv6_feed_forward.1} parent=1 // loop_pre_header
      _
    $region3: #{rwkv6_feed_forward.1} parent=1 // loop_header
      %s12 = sphi 0, %s16
      %p13 = scmp.ge.s32.totalorder %s12, 10
      %s19 = sphi 0, %s31
      %s20 = sphi 0, %s27
      %s21 = sphi 0, %s19
      %s22 = sphi 0, %s20
      %s23 = sphi 0, %s21
      %s24 = sphi 0, %s22
      %s34 = sphi 0, %s36
      %s37 = sphi 0, %s34
      %s38 = sphi 0, %s37
      %s54 = sphi 0, %s38
      %s60 = sphi 0, %s62
      %s63 = sphi 0, %s60
      %s64 = sphi 0, %s63
      %s80 = sphi 0, %s64
      %s84 = sphi 0, %s84
      %s86 = sphi 0, %s84
      %s87 = sphi 0, %s86
      %s101 = sphi 0, %s87
      %s107 = sphi 0, %s109
      %s110 = sphi 0, %s107
      %s111 = sphi 0, %s110
      %s127 = sphi 0, %s111
      %s133 = sphi 0, %s135
      %s136 = sphi 0, %s133
      %s137 = sphi 0, %s136
      %s153 = sphi 0, %s137
      %s157 = sphi 0, %s157
      %s159 = sphi 0, %s157
      %s160 = sphi 0, %s159
      %s174 = sphi 0, %s160
      %s180 = sphi 0, %s182
      %s183 = sphi 0, %s180
      %s184 = sphi 0, %s183
      %s200 = sphi 0, %s184
    $region4: #{rwkv6_feed_forward.1} parent=1 // loop_header_branch
      %15 = sbr.rel (%p13) target = $region8
    $region5: #{rwkv6_feed_forward.1} parent=1 // loop_body
      %s17 = ssub.s32 %s12, 1
      %s18 = ssub.s32 %s12, 2
      %s25 = sadd.s32 1, %s20
      %p26 = scmp.ge.s32.totalorder %s25, 2
      %s27 = scalar_select %p26, 0, %s25
      %s28 = sadd.s32 1, %s19
      %s29 = scalar_select %p26, %s28, %s19
      %p30 = scmp.ge.s32.totalorder %s29, 4
      %s31 = scalar_select %p30, 0, %s29
      %s32 = ssub.s32 %s19, %s31
      %p33 = scmp.eq.s32.totalorder %s32, 0
      %s35 = sadd.s32 %s34, 1
      %s36 = scalar_select %p33, %s34, %s35
      %p39 = pneg %p33
      %p40 = scmp.eq.s32.totalorder %s12, 7
      %p41 = por %p39, %p40
      %p42 = scmp.ne.s32.totalorder %s34, %s37
      %p43 = scmp.eq.s32.totalorder %s12, 0
      %p44 = por %p42, %p43
      %p45 = scmp.ne.s32.totalorder %s34, %s37
      %p46 = scmp.eq.s32.totalorder %s17, 7
      %p47 = por %p45, %p46
      %p48 = scmp.ne.s32.totalorder %s37, %s38
      %p49 = scmp.eq.s32.totalorder %s17, 0
      %p50 = por %p48, %p49
      %p51 = scmp.ne.s32.totalorder %s37, %s38
      %p52 = scmp.eq.s32.totalorder %s18, 7
      %p53 = por %p51, %p52
      %p55 = scmp.ne.s32.totalorder %s38, %s54
      %p56 = scmp.eq.s32.totalorder %s18, 0
      %p57 = por %p55, %p56
      %s58 = ssub.s32 %s19, %s31
      %p59 = scmp.eq.s32.totalorder %s58, 0
      %s61 = sadd.s32 %s60, 1
      %s62 = scalar_select %p59, %s60, %s61
      %p65 = pneg %p59
      %p66 = scmp.eq.s32.totalorder %s12, 7
      %p67 = por %p65, %p66
      %p68 = scmp.ne.s32.totalorder %s60, %s63
      %p69 = scmp.eq.s32.totalorder %s12, 0
      %p70 = por %p68, %p69
      %p71 = scmp.ne.s32.totalorder %s60, %s63
      %p72 = scmp.eq.s32.totalorder %s17, 7
      %p73 = por %p71, %p72
      %p74 = scmp.ne.s32.totalorder %s63, %s64
      %p75 = scmp.eq.s32.totalorder %s17, 0
      %p76 = por %p74, %p75
      %p77 = scmp.ne.s32.totalorder %s63, %s64
      %p78 = scmp.eq.s32.totalorder %s18, 7
      %p79 = por %p77, %p78
      %p81 = scmp.ne.s32.totalorder %s64, %s80
      %p82 = scmp.eq.s32.totalorder %s18, 0
      %p83 = por %p81, %p82
      %s85 = sadd.s32 %s84, 1
      %p88 = scmp.eq.s32.totalorder %s12, 7
      %p89 = scmp.ne.s32.totalorder %s84, %s86
      %p90 = scmp.eq.s32.totalorder %s12, 0
      %p91 = por %p89, %p90
      %p92 = scmp.ne.s32.totalorder %s84, %s86
      %p93 = scmp.eq.s32.totalorder %s17, 7
      %p94 = por %p92, %p93
      %p95 = scmp.ne.s32.totalorder %s86, %s87
      %p96 = scmp.eq.s32.totalorder %s17, 0
      %p97 = por %p95, %p96
      %p98 = scmp.ne.s32.totalorder %s86, %s87
      %p99 = scmp.eq.s32.totalorder %s18, 7
      %p100 = por %p98, %p99
      %p102 = scmp.ne.s32.totalorder %s87, %s101
      %p103 = scmp.eq.s32.totalorder %s18, 0
      %p104 = por %p102, %p103
      %s105 = ssub.s32 %s20, %s27
      %p106 = scmp.eq.s32.totalorder %s105, 0
      %s108 = sadd.s32 %s107, 1
      %s109 = scalar_select %p106, %s107, %s108
      %p112 = pneg %p106
      %p113 = scmp.eq.s32.totalorder %s12, 7
      %p114 = por %p112, %p113
      %p115 = scmp.ne.s32.totalorder %s107, %s110
      %p116 = scmp.eq.s32.totalorder %s12, 0
      %p117 = por %p115, %p116
      %p118 = scmp.ne.s32.totalorder %s107, %s110
      %p119 = scmp.eq.s32.totalorder %s17, 7
      %p120 = por %p118, %p119
      %p121 = scmp.ne.s32.totalorder %s110, %s111
      %p122 = scmp.eq.s32.totalorder %s17, 0
      %p123 = por %p121, %p122
      %p124 = scmp.ne.s32.totalorder %s110, %s111
      %p125 = scmp.eq.s32.totalorder %s18, 7
      %p126 = por %p124, %p125
      %p128 = scmp.ne.s32.totalorder %s111, %s127
      %p129 = scmp.eq.s32.totalorder %s18, 0
      %p130 = por %p128, %p129
      %s131 = ssub.s32 %s20, %s27
      %p132 = scmp.eq.s32.totalorder %s131, 0
      %s134 = sadd.s32 %s133, 1
      %s135 = scalar_select %p132, %s133, %s134
      %p138 = pneg %p132
      %p139 = scmp.eq.s32.totalorder %s12, 7
      %p140 = por %p138, %p139
      %p141 = scmp.ne.s32.totalorder %s133, %s136
      %p142 = scmp.eq.s32.totalorder %s12, 0
      %p143 = por %p141, %p142
      %p144 = scmp.ne.s32.totalorder %s133, %s136
      %p145 = scmp.eq.s32.totalorder %s17, 7
      %p146 = por %p144, %p145
      %p147 = scmp.ne.s32.totalorder %s136, %s137
      %p148 = scmp.eq.s32.totalorder %s17, 0
      %p149 = por %p147, %p148
      %p150 = scmp.ne.s32.totalorder %s136, %s137
      %p151 = scmp.eq.s32.totalorder %s18, 7
      %p152 = por %p150, %p151
      %p154 = scmp.ne.s32.totalorder %s137, %s153
      %p155 = scmp.eq.s32.totalorder %s18, 0
      %p156 = por %p154, %p155
      %s158 = sadd.s32 %s157, 1
      %p161 = scmp.eq.s32.totalorder %s12, 7
      %p162 = scmp.ne.s32.totalorder %s157, %s159
      %p163 = scmp.eq.s32.totalorder %s12, 0
      %p164 = por %p162, %p163
      %p165 = scmp.ne.s32.totalorder %s157, %s159
      %p166 = scmp.eq.s32.totalorder %s17, 7
      %p167 = por %p165, %p166
      %p168 = scmp.ne.s32.totalorder %s159, %s160
      %p169 = scmp.eq.s32.totalorder %s17, 0
      %p170 = por %p168, %p169
      %p171 = scmp.ne.s32.totalorder %s159, %s160
      %p172 = scmp.eq.s32.totalorder %s18, 7
      %p173 = por %p171, %p172
      %p175 = scmp.ne.s32.totalorder %s160, %s174
      %p176 = scmp.eq.s32.totalorder %s18, 0
      %p177 = por %p175, %p176
      %s178 = ssub.s32 %s19, %s31
      %p179 = scmp.eq.s32.totalorder %s178, 0
      %s181 = sadd.s32 %s180, 1
      %s182 = scalar_select %p179, %s180, %s181
      %p185 = pneg %p179
      %p186 = scmp.eq.s32.totalorder %s12, 7
      %p187 = por %p185, %p186
      %p188 = scmp.ne.s32.totalorder %s180, %s183
      %p189 = scmp.eq.s32.totalorder %s12, 0
      %p190 = por %p188, %p189
      %p191 = scmp.ne.s32.totalorder %s180, %s183
      %p192 = scmp.eq.s32.totalorder %s17, 7
      %p193 = por %p191, %p192
      %p194 = scmp.ne.s32.totalorder %s183, %s184
      %p195 = scmp.eq.s32.totalorder %s17, 0
      %p196 = por %p194, %p195
      %p197 = scmp.ne.s32.totalorder %s183, %s184
      %p198 = scmp.eq.s32.totalorder %s18, 7
      %p199 = por %p197, %p198
      %p201 = scmp.ne.s32.totalorder %s184, %s200
      %p202 = scmp.eq.s32.totalorder %s18, 0
      %p203 = por %p201, %p202
      %p204 = scmp.le.s32.totalorder 1, %s12
      %p205 = scmp.lt.s32.totalorder %s12, 9
      %p206 = pnand %p204, %p205
      %p207 = pneg %p206
      // Predicated region
      $region9: #{rwkv6_feed_forward.1} parent=5 // pred_check
        _
      $region10: #{rwkv6_feed_forward.1} parent=5 // pred_check_branch
        %209 = sbr.rel (%p206) target = $region12
      $region11: #{rwkv6_feed_forward.1} parent=5 // pred_region
        %s210 = ssub.s32 %s12, 1
        // Predicated region
        $region13: #{rwkv6_feed_forward.1} parent=11 // pred_check
          %p211 = pneg %p97
        $region14: #{rwkv6_feed_forward.1} parent=11 // pred_check_branch
          %213 = sbr.rel (%p211) target = $region16
        $region15: #{rwkv6_feed_forward.1} parent=11 // pred_region
          _
        $region16: #{rwkv6_feed_forward.1} parent=11 // pred_fallthru
          _
        // Predicated region
        $region17: #{rwkv6_feed_forward.1} parent=11 // pred_check
          %p214 = pneg %p170
        $region18: #{rwkv6_feed_forward.1} parent=11 // pred_check_branch
          %216 = sbr.rel (%p214) target = $region20
        $region19: #{rwkv6_feed_forward.1} parent=11 // pred_region
          _
        $region20: #{rwkv6_feed_forward.1} parent=11 // pred_fallthru
          _
      $region12: #{rwkv6_feed_forward.1} parent=5 // pred_fallthru
        _
      %p217 = scmp.lt.s32.totalorder %s12, 8
      // Predicated region
      $region21: #{rwkv6_feed_forward.1} parent=5 // pred_check
        %p218 = pneg %p217
      $region22: #{rwkv6_feed_forward.1} parent=5 // pred_check_branch
        %220 = sbr.rel (%p218) target = $region24
      $region23: #{rwkv6_feed_forward.1} parent=5 // pred_region
        // Predicated region
        $region25: #{rwkv6_feed_forward.1} parent=23 // pred_check
          %p221 = pneg %p44
        $region26: #{rwkv6_feed_forward.1} parent=23 // pred_check_branch
          %223 = sbr.rel (%p221) target = $region28
        $region27: #{rwkv6_feed_forward.1} parent=23 // pred_region
          %s224 = smul.u32 8, %s19
          %p225 = scmp.lt.s32.totalorder %s224, 31
          %s226 = scalar_select %p225, %s224, 31
          %s227 = smul.addr %s226, 8
          %s228 = scalar_lea.vmem %s0, %s227
          %s229 = smul.u32 8, %s19
        $region28: #{rwkv6_feed_forward.1} parent=23 // pred_fallthru
          _
        // Predicated region
        $region29: #{rwkv6_feed_forward.1} parent=23 // pred_check
          %p230 = pneg %p70
        $region30: #{rwkv6_feed_forward.1} parent=23 // pred_check_branch
          %232 = sbr.rel (%p230) target = $region32
        $region31: #{rwkv6_feed_forward.1} parent=23 // pred_region
          %p233 = scmp.lt.s32.totalorder %s19, 3
          %s234 = scalar_select %p233, %s19, 3
          %s235 = scalar_lea.vmem %s1, %s234
        $region32: #{rwkv6_feed_forward.1} parent=23 // pred_fallthru
          _
        // Predicated region
        $region33: #{rwkv6_feed_forward.1} parent=23 // pred_check
          %p236 = pneg %p117
        $region34: #{rwkv6_feed_forward.1} parent=23 // pred_check_branch
          %238 = sbr.rel (%p236) target = $region36
        $region35: #{rwkv6_feed_forward.1} parent=23 // pred_region
          %s239 = sand.u32 %s107, 1
          %s240 = sand.u32 %s107, 1
          %s241 = smul.addr %s240, 64
          %s242 = scalar_lea.vmem [#allocation5], %s241
          %s243 = smul.addr %s20, 8
          %s244 = scalar_lea.vmem %s3, %s243
          // Predicated region
          $region37: #{rwkv6_feed_forward.1} parent=35 // pred_check
            _
          $region38: #{rwkv6_feed_forward.1} parent=35 // pred_check_branch
            %246 = sbr.rel (0) target = $region40
          $region39: #{rwkv6_feed_forward.1} parent=35 // pred_region
            // Predicated region
            $region41: #{rwkv6_feed_forward.1} parent=39 // pred_check
              _
            $region42: #{rwkv6_feed_forward.1} parent=39 // pred_check_branch
              %248 = sbr.rel (0) target = $region44
            $region43: #{rwkv6_feed_forward.1} parent=39 // pred_region
              // Predicated region
              $region56: #{rwkv6_feed_forward.1} parent=43 // pred_check
                _
              $region57: #{rwkv6_feed_forward.1} parent=43 // pred_check_branch
                %278 = sbr.rel (0) target = $region59
              $region58: #{rwkv6_feed_forward.1} parent=43 // pred_region
                loop: start=0, step=1, limit=1
                $region60: #{rwkv6_feed_forward.1} parent=58 // loop_pre_header
                  _
                $region61: #{rwkv6_feed_forward.1} parent=58 // loop_header
                  %s280 = sphi 0, %s284
                  %p281 = scmp.ge.s32.totalorder %s280, 1
                  %s285 = sphi %s244, %s244
                  %s286 = sphi %s242, %s242
                $region62: #{rwkv6_feed_forward.1} parent=58 // loop_header_branch
                  %283 = sbr.rel (%p281) target = $region66
                $region63: #{rwkv6_feed_forward.1} parent=58 // loop_body
                  %v287 = vld [vmem:[%s285] sm:$0xff]
                  %288 = vst [vmem:[%s286] sm:$0xff] %v287
                  %v289 = vld [vmem:[%s285 + $0x10] sm:$0xff]
                  %290 = vst [vmem:[%s286 + $0x8] sm:$0xff] %v289
                  %v291 = vld [vmem:[%s285 + $0x20] sm:$0xff]
                  %292 = vst [vmem:[%s286 + $0x10] sm:$0xff] %v291
                  %v293 = vld [vmem:[%s285 + $0x30] sm:$0xff]
                  %294 = vst [vmem:[%s286 + $0x18] sm:$0xff] %v293
                  %v295 = vld [vmem:[%s285 + $0x40] sm:$0xff]
                  %296 = vst [vmem:[%s286 + $0x20] sm:$0xff] %v295
                  %v297 = vld [vmem:[%s285 + $0x50] sm:$0xff]
                  %298 = vst [vmem:[%s286 + $0x28] sm:$0xff] %v297
                  %v299 = vld [vmem:[%s285 + $0x60] sm:$0xff]
                  %300 = vst [vmem:[%s286 + $0x30] sm:$0xff] %v299
                  %v301 = vld [vmem:[%s285 + $0x70] sm:$0xff]
                  %302 = vst [vmem:[%s286 + $0x38] sm:$0xff] %v301
                $region64: #{rwkv6_feed_forward.1} parent=58 // loop_footer
                  %s284 = sadd.s32 1, %s280
                $region65: #{rwkv6_feed_forward.1} parent=58 // loop_footer_branch
                  %279 = sbr.rel target = $region61
                $region66: #{rwkv6_feed_forward.1} parent=58 // loop_exit
                  _
              $region59: #{rwkv6_feed_forward.1} parent=43 // pred_fallthru
                _
              // Predicated region
              $region67: #{rwkv6_feed_forward.1} parent=43 // pred_check
                _
              $region68: #{rwkv6_feed_forward.1} parent=43 // pred_check_branch
                %304 = sbr.rel target = $region70
              $region69: #{rwkv6_feed_forward.1} parent=43 // pred_region
                _
              $region70: #{rwkv6_feed_forward.1} parent=43 // pred_fallthru
                _
            $region44: #{rwkv6_feed_forward.1} parent=39 // pred_fallthru
              _
            // Predicated region
            $region45: #{rwkv6_feed_forward.1} parent=39 // pred_check
              _
            $region46: #{rwkv6_feed_forward.1} parent=39 // pred_check_branch
              %250 = sbr.rel target = $region48
            $region47: #{rwkv6_feed_forward.1} parent=39 // pred_region
              %s252 = ssub.s32 256, 1
              loop: start=0, step=1, limit=1
              $region49: #{rwkv6_feed_forward.1} parent=47 // loop_pre_header
                _
              $region50: #{rwkv6_feed_forward.1} parent=47 // loop_header
                %s254 = sphi 0, %s258
                %p255 = scmp.ge.s32.totalorder %s254, 1
                %s259 = sphi %s244, %s244
                %s260 = sphi %s242, %s242
              $region51: #{rwkv6_feed_forward.1} parent=47 // loop_header_branch
                %257 = sbr.rel (%p255) target = $region55
              $region52: #{rwkv6_feed_forward.1} parent=47 // loop_body
                %v261 = vld [vmem:[%s259] sm:%s252]
                %262 = vst [vmem:[%s260] sm:%s252] %v261
                %v263 = vld [vmem:[%s259 + $0x10] sm:%s252]
                %264 = vst [vmem:[%s260 + $0x8] sm:%s252] %v263
                %v265 = vld [vmem:[%s259 + $0x20] sm:%s252]
                %266 = vst [vmem:[%s260 + $0x10] sm:%s252] %v265
                %v267 = vld [vmem:[%s259 + $0x30] sm:%s252]
                %268 = vst [vmem:[%s260 + $0x18] sm:%s252] %v267
                %v269 = vld [vmem:[%s259 + $0x40] sm:%s252]
                %270 = vst [vmem:[%s260 + $0x20] sm:%s252] %v269
                %v271 = vld [vmem:[%s259 + $0x50] sm:%s252]
                %272 = vst [vmem:[%s260 + $0x28] sm:%s252] %v271
                %v273 = vld [vmem:[%s259 + $0x60] sm:%s252]
                %274 = vst [vmem:[%s260 + $0x30] sm:%s252] %v273
                %v275 = vld [vmem:[%s259 + $0x70] sm:%s252]
                %276 = vst [vmem:[%s260 + $0x38] sm:%s252] %v275
              $region53: #{rwkv6_feed_forward.1} parent=47 // loop_footer
                %s258 = sadd.s32 1, %s254
              $region54: #{rwkv6_feed_forward.1} parent=47 // loop_footer_branch
                %253 = sbr.rel target = $region50
              $region55: #{rwkv6_feed_forward.1} parent=47 // loop_exit
                _
            $region48: #{rwkv6_feed_forward.1} parent=39 // pred_fallthru
              _
          $region40: #{rwkv6_feed_forward.1} parent=35 // pred_fallthru
            _
          %305 = vnop
        $region36: #{rwkv6_feed_forward.1} parent=23 // pred_fallthru
          _
        // Predicated region
        $region71: #{rwkv6_feed_forward.1} parent=23 // pred_check
          %p306 = pneg %p143
        $region72: #{rwkv6_feed_forward.1} parent=23 // pred_check_branch
          %308 = sbr.rel (%p306) target = $region74
        $region73: #{rwkv6_feed_forward.1} parent=23 // pred_region
          %s309 = smul.u32 16, %s20
          %p310 = scmp.lt.s32.totalorder %s309, 31
          %s311 = scalar_select %p310, %s309, 31
          %s312 = smul.addr %s311, 8
          %s313 = scalar_lea.vmem %s4, %s312
          %s314 = smul.u32 16, %s20
        $region74: #{rwkv6_feed_forward.1} parent=23 // pred_fallthru
          _
      $region24: #{rwkv6_feed_forward.1} parent=5 // pred_fallthru
        _
      %p315 = scmp.le.s32.totalorder 1, %s12
      %p316 = scmp.lt.s32.totalorder %s12, 9
      %p317 = pnand %p315, %p316
      %p318 = pneg %p317
      // Predicated region
      $region75: #{rwkv6_feed_forward.1} parent=5 // pred_check
        _
      $region76: #{rwkv6_feed_forward.1} parent=5 // pred_check_branch
        %320 = sbr.rel (%p317) target = $region78
      $region77: #{rwkv6_feed_forward.1} parent=5 // pred_region
        %s321 = ssub.s32 %s12, 1
        %s322 = sand.u32 %s110, 1
        %s323 = sand.u32 %s110, 1
        %s324 = smul.addr %s323, 64
        %s325 = scalar_lea.vmem [#allocation5], %s324
        // Predicated region
        $region79: #{rwkv6_feed_forward.1} parent=77 // pred_check
          %p326 = pneg %p123
        $region80: #{rwkv6_feed_forward.1} parent=77 // pred_check_branch
          %328 = sbr.rel (%p326) target = $region82
        $region81: #{rwkv6_feed_forward.1} parent=77 // pred_region
          _
        $region82: #{rwkv6_feed_forward.1} parent=77 // pred_fallthru
          _
        %s329 = smul.u32 8, %s21
        %p330 = scmp.lt.s32.totalorder %s329, 31
        %s331 = scalar_select %p330, %s329, 31
        %s332 = smul.addr %s331, 8
        %s333 = scalar_lea.vmem %s0, %s332
        %p334 = pneg %p50
        %p335 = pneg %p47
        %p336 = scmp.lt.s32.totalorder %s21, 3
        %s337 = scalar_select %p336, %s21, 3
        %s338 = scalar_lea.vmem %s1, %s337
        %p339 = pneg %p76
        %p340 = pneg %p73
        %p341 = pneg %p97
        %p342 = pneg %p94
        %s343 = sand.u32 %s110, 1
        %s344 = sand.u32 %s110, 1
        %s345 = smul.addr %s344, 64
        %s346 = scalar_lea.vmem [#allocation5], %s345
        %p347 = pneg %p123
        %p348 = pneg %p120
        %s349 = smul.u32 16, %s22
        %p350 = scmp.lt.s32.totalorder %s349, 31
        %s351 = scalar_select %p350, %s349, 31
        %s352 = smul.addr %s351, 8
        %s353 = scalar_lea.vmem %s4, %s352
        %p354 = pneg %p149
        %p355 = pneg %p146
        %p356 = pneg %p170
        %p357 = pneg %p167
        %p358 = pneg %p196
        %p359 = pneg %p193
        %s360 = smul.u32 8, %s21
        %p361 = scmp.lt.s32.totalorder %s360, 31
        %s362 = scalar_select %p361, %s360, 31
        %s363 = smul.addr %s362, 8
        %s364 = scalar_lea.vmem %s6, %s363
        %s365 = smul.u32 8, %s21
        %p366 = scmp.lt.s32.totalorder %s365, 31
        %s367 = scalar_select %p366, %s365, 31
        %s368 = smul.addr %s367, 8
        %s369 = scalar_lea.vmem %s0, %s368
        %s370 = smul.u32 8, %s21
        %p371 = scmp.lt.s32.totalorder %s21, 3
        %s372 = scalar_select %p371, %s21, 3
        %s373 = scalar_lea.vmem %s1, %s372
        %s374 = smul.u32 16, %s22
        %p375 = scmp.lt.s32.totalorder %s374, 31
        %s376 = scalar_select %p375, %s374, 31
        %s377 = smul.addr %s376, 8
        %s378 = scalar_lea.vmem %s4, %s377
        %s379 = smul.u32 16, %s22
        %s380 = smul.u32 8, %s21
        %p381 = scmp.lt.s32.totalorder %s380, 31
        %s382 = scalar_select %p381, %s380, 31
        %s383 = smul.addr %s382, 8
        %s384 = scalar_lea.vmem %s6, %s383
        %s385 = smul.u32 8, %s21
        %p386 = scmp.eq.s32.totalorder %s22, 0
        // Predicated region
        $region83: #{rwkv6_feed_forward.1} parent=77 // pred_check
          %p387 = pneg %p386
        $region84: #{rwkv6_feed_forward.1} parent=77 // pred_check_branch
          %389 = sbr.rel (%p387) target = $region86
        $region85: #{rwkv6_feed_forward.1} parent=77 // pred_region
          %v390 = vld [vmem:[%s2] sm:$0xf]
          %v391 = vld [vmem:[%s369] sm:$0xff]
          %v392 = vld [vmem:[%s369 + $0x8] sm:$0xff]
          %v393 = vld [vmem:[%s369 + $0x10] sm:$0xff]
          %v394 = vld [vmem:[%s369 + $0x18] sm:$0xff]
          %v395 = vld [vmem:[%s369 + $0x20] sm:$0xff]
          %v396 = vld [vmem:[%s369 + $0x28] sm:$0xff]
          %v397 = vld [vmem:[%s369 + $0x30] sm:$0xff]
          %v398 = vld [vmem:[%s369 + $0x38] sm:$0xff]
          %vm399 = vcmask 523264
          %v400 = vsel %vm399, %v391, 0.0
          %401 = vadd.xlane.f32.xlu0 %v400
          %v402 = vpop.xlane.xlu0 %401
          %v403 = vsel %vm399, %v392, 0.0
          %404 = vadd.xlane.f32.xlu0 %v403
          %v405 = vpop.xlane.xlu0 %404
          %v406 = vsel %vm399, %v393, 0.0
          %407 = vadd.xlane.f32.xlu0 %v406
          %v408 = vpop.xlane.xlu0 %407
          %v409 = vsel %vm399, %v394, 0.0
          %410 = vadd.xlane.f32.xlu0 %v409
          %v411 = vpop.xlane.xlu0 %410
          %v412 = vsel %vm399, %v395, 0.0
          %413 = vadd.xlane.f32.xlu0 %v412
          %v414 = vpop.xlane.xlu0 %413
          %v415 = vsel %vm399, %v396, 0.0
          %416 = vadd.xlane.f32.xlu0 %v415
          %v417 = vpop.xlane.xlu0 %416
          %v418 = vsel %vm399, %v397, 0.0
          %419 = vadd.xlane.f32.xlu0 %v418
          %v420 = vpop.xlane.xlu0 %419
          %v421 = vsel %vm399, %v398, 0.0
          %422 = vadd.xlane.f32.xlu0 %v421
          %v423 = vpop.xlane.xlu0 %422
          %v424 = vrcp.pop 64.0
          %v425 = vmul.f32 64.0, %v424
          %v426 = vsub.f32 1.0, %v425
          %v427 = vmul.f32 %v424, %v426
          %v428 = vadd.f32 %v424, %v427
          %vm429 = vweird.f32 %v424
          %v430 = vsel %vm429, %v424, %v428
          %v431 = vmul.f32 %v402, %v430
          %v432 = vmul.f32 %v405, %v430
          %v433 = vmul.f32 %v408, %v430
          %v434 = vmul.f32 %v411, %v430
          %v435 = vmul.f32 %v414, %v430
          %v436 = vmul.f32 %v417, %v430
          %v437 = vmul.f32 %v420, %v430
          %v438 = vmul.f32 %v423, %v430
          %v439 = vsub.f32 %v391, %v431
          %v440 = vsub.f32 %v392, %v432
          %v441 = vsub.f32 %v393, %v433
          %v442 = vsub.f32 %v394, %v434
          %v443 = vsub.f32 %v395, %v435
          %v444 = vsub.f32 %v396, %v436
          %v445 = vsub.f32 %v397, %v437
          %v446 = vsub.f32 %v398, %v438
          %v447 = vmul.f32 %v439, %v439
          %v448 = vmul.f32 %v440, %v440
          %v449 = vmul.f32 %v441, %v441
          %v450 = vmul.f32 %v442, %v442
          %v451 = vmul.f32 %v443, %v443
          %v452 = vmul.f32 %v444, %v444
          %v453 = vmul.f32 %v445, %v445
          %v454 = vmul.f32 %v446, %v446
          %v455 = vsel %vm399, %v447, 0.0
          %456 = vadd.xlane.f32.xlu0 %v455
          %v457 = vpop.xlane.xlu0 %456
          %v458 = vsel %vm399, %v448, 0.0
          %459 = vadd.xlane.f32.xlu0 %v458
          %v460 = vpop.xlane.xlu0 %459
          %v461 = vsel %vm399, %v449, 0.0
          %462 = vadd.xlane.f32.xlu0 %v461
          %v463 = vpop.xlane.xlu0 %462
          %v464 = vsel %vm399, %v450, 0.0
          %465 = vadd.xlane.f32.xlu0 %v464
          %v466 = vpop.xlane.xlu0 %465
          %v467 = vsel %vm399, %v451, 0.0
          %468 = vadd.xlane.f32.xlu0 %v467
          %v469 = vpop.xlane.xlu0 %468
          %v470 = vsel %vm399, %v452, 0.0
          %471 = vadd.xlane.f32.xlu0 %v470
          %v472 = vpop.xlane.xlu0 %471
          %v473 = vsel %vm399, %v453, 0.0
          %474 = vadd.xlane.f32.xlu0 %v473
          %v475 = vpop.xlane.xlu0 %474
          %v476 = vsel %vm399, %v454, 0.0
          %477 = vadd.xlane.f32.xlu0 %v476
          %v478 = vpop.xlane.xlu0 %477
          %v479 = vmul.f32 %v457, %v430
          %v480 = vmul.f32 %v460, %v430
          %v481 = vmul.f32 %v463, %v430
          %v482 = vmul.f32 %v466, %v430
          %v483 = vmul.f32 %v469, %v430
          %v484 = vmul.f32 %v472, %v430
          %v485 = vmul.f32 %v475, %v430
          %v486 = vmul.f32 %v478, %v430
          %v487 = vadd.f32 %v479, 1e-05
          %v488 = vadd.f32 %v480, 1e-05
          %v489 = vadd.f32 %v481, 1e-05
          %v490 = vadd.f32 %v482, 1e-05
          %v491 = vadd.f32 %v483, 1e-05
          %v492 = vadd.f32 %v484, 1e-05
          %v493 = vadd.f32 %v485, 1e-05
          %v494 = vadd.f32 %v486, 1e-05
          %v495 = vrsqrt.pop %v487
          %v496 = vmul.f32 %v495, %v487
          %v497 = vmul.f32 %v496, %v495
          %v498 = vmul.f32 0.5, %v497
          %v499 = vsub.f32 1.5, %v498
          %v500 = vmul.f32 %v495, %v499
          %vm501 = vweird.f32 %v487
          %vm502 = vweird.f32 %v495
          %vm503 = vmor %vm501, %vm502
          %v504 = vsel %vm503, %v495, %v500
          %v505 = vrsqrt.pop %v488
          %v506 = vmul.f32 %v505, %v488
          %v507 = vmul.f32 %v506, %v505
          %v508 = vmul.f32 0.5, %v507
          %v509 = vsub.f32 1.5, %v508
          %v510 = vmul.f32 %v505, %v509
          %vm511 = vweird.f32 %v488
          %vm512 = vweird.f32 %v505
          %vm513 = vmor %vm511, %vm512
          %v514 = vsel %vm513, %v505, %v510
          %v515 = vrsqrt.pop %v489
          %v516 = vmul.f32 %v515, %v489
          %v517 = vmul.f32 %v516, %v515
          %v518 = vmul.f32 0.5, %v517
          %v519 = vsub.f32 1.5, %v518
          %v520 = vmul.f32 %v515, %v519
          %vm521 = vweird.f32 %v489
          %vm522 = vweird.f32 %v515
          %vm523 = vmor %vm521, %vm522
          %v524 = vsel %vm523, %v515, %v520
          %v525 = vrsqrt.pop %v490
          %v526 = vmul.f32 %v525, %v490
          %v527 = vmul.f32 %v526, %v525
          %v528 = vmul.f32 0.5, %v527
          %v529 = vsub.f32 1.5, %v528
          %v530 = vmul.f32 %v525, %v529
          %vm531 = vweird.f32 %v490
          %vm532 = vweird.f32 %v525
          %vm533 = vmor %vm531, %vm532
          %v534 = vsel %vm533, %v525, %v530
          %v535 = vrsqrt.pop %v491
          %v536 = vmul.f32 %v535, %v491
          %v537 = vmul.f32 %v536, %v535
          %v538 = vmul.f32 0.5, %v537
          %v539 = vsub.f32 1.5, %v538
          %v540 = vmul.f32 %v535, %v539
          %vm541 = vweird.f32 %v491
          %vm542 = vweird.f32 %v535
          %vm543 = vmor %vm541, %vm542
          %v544 = vsel %vm543, %v535, %v540
          %v545 = vrsqrt.pop %v492
          %v546 = vmul.f32 %v545, %v492
          %v547 = vmul.f32 %v546, %v545
          %v548 = vmul.f32 0.5, %v547
          %v549 = vsub.f32 1.5, %v548
          %v550 = vmul.f32 %v545, %v549
          %vm551 = vweird.f32 %v492
          %vm552 = vweird.f32 %v545
          %vm553 = vmor %vm551, %vm552
          %v554 = vsel %vm553, %v545, %v550
          %v555 = vrsqrt.pop %v493
          %v556 = vmul.f32 %v555, %v493
          %v557 = vmul.f32 %v556, %v555
          %v558 = vmul.f32 0.5, %v557
          %v559 = vsub.f32 1.5, %v558
          %v560 = vmul.f32 %v555, %v559
          %vm561 = vweird.f32 %v493
          %vm562 = vweird.f32 %v555
          %vm563 = vmor %vm561, %vm562
          %v564 = vsel %vm563, %v555, %v560
          %v565 = vrsqrt.pop %v494
          %v566 = vmul.f32 %v565, %v494
          %v567 = vmul.f32 %v566, %v565
          %v568 = vmul.f32 0.5, %v567
          %v569 = vsub.f32 1.5, %v568
          %v570 = vmul.f32 %v565, %v569
          %vm571 = vweird.f32 %v494
          %vm572 = vweird.f32 %v565
          %vm573 = vmor %vm571, %vm572
          %v574 = vsel %vm573, %v565, %v570
          %v575 = vmul.f32 %v439, %v504
          %v576 = vmul.f32 %v440, %v514
          %v577 = vmul.f32 %v441, %v524
          %v578 = vmul.f32 %v442, %v534
          %v579 = vmul.f32 %v443, %v544
          %v580 = vmul.f32 %v444, %v554
          %v581 = vmul.f32 %v445, %v564
          %v582 = vmul.f32 %v446, %v574
          %v583 = vperm.slane %v390, 0
          %v584 = vmul.f32 %v575, %v583
          %v585 = vmul.f32 %v576, %v583
          %v586 = vmul.f32 %v577, %v583
          %v587 = vmul.f32 %v578, %v583
          %v588 = vmul.f32 %v579, %v583
          %v589 = vmul.f32 %v580, %v583
          %v590 = vmul.f32 %v581, %v583
          %v591 = vmul.f32 %v582, %v583
          %v592 = vperm.slane %v390, 1
          %v593 = vadd.f32 %v584, %v592
          %v594 = vadd.f32 %v585, %v592
          %v595 = vadd.f32 %v586, %v592
          %v596 = vadd.f32 %v587, %v592
          %v597 = vadd.f32 %v588, %v592
          %v598 = vadd.f32 %v589, %v592
          %v599 = vadd.f32 %v590, %v592
          %v600 = vadd.f32 %v591, %v592
          %v601 = vlaneseq
          %v602 = vshrl.u32 %v601, 7
          %v603 = vadd.s32 %v602, 8
          %v604 = vadd.s32 %v602, 16
          %v605 = vadd.s32 %v602, 24
          %v606 = vadd.s32 %v602, 32
          %v607 = vadd.s32 %v602, 40
          %v608 = vadd.s32 %v602, 48
          %v609 = vadd.s32 %v602, 56
          %vm610 = vcmp.eq.s32.totalorder %v602, 0
          %vm611 = vcmp.eq.s32.totalorder %v603, 0
          %vm612 = vcmp.eq.s32.totalorder %v604, 0
          %vm613 = vcmp.eq.s32.totalorder %v605, 0
          %vm614 = vcmp.eq.s32.totalorder %v606, 0
          %vm615 = vcmp.eq.s32.totalorder %v607, 0
          %vm616 = vcmp.eq.s32.totalorder %v608, 0
          %vm617 = vcmp.eq.s32.totalorder %v609, 0
          %v618 = vld [vmem:[%s373] sm:$0x1]
          %v619 = vrot.slane %v593, 7
          %v620 = vrot.slane %v594, 7
          %v621 = vrot.slane %v595, 7
          %v622 = vrot.slane %v596, 7
          %v623 = vrot.slane %v597, 7
          %v624 = vrot.slane %v598, 7
          %v625 = vrot.slane %v599, 7
          %v626 = vrot.slane %v600, 7
          %vm627 = vcmp.lt.s32.totalorder %v602, 1
          %v628 = vsel %vm627, %v625, %v626
          %v629 = vsel %vm627, %v624, %v625
          %v630 = vsel %vm627, %v623, %v624
          %v631 = vsel %vm627, %v622, %v623
          %v632 = vsel %vm627, %v621, %v622
          %v633 = vsel %vm627, %v620, %v621
          %v634 = vsel %vm627, %v619, %v620
          %v635 = vsel %vm627, %v626, %v619
          %v636 = vsel %vm610, 1, 0
          %v637 = vsel %vm611, 1, 0
          %v638 = vsel %vm612, 1, 0
          %v639 = vsel %vm613, 1, 0
          %v640 = vsel %vm614, 1, 0
          %v641 = vsel %vm615, 1, 0
          %v642 = vsel %vm616, 1, 0
          %v643 = vsel %vm617, 1, 0
          %vm644 = vcmp.eq.s32.totalorder %v636, 1
          %vm645 = vcmp.eq.s32.totalorder %v637, 1
          %vm646 = vcmp.eq.s32.totalorder %v638, 1
          %vm647 = vcmp.eq.s32.totalorder %v639, 1
          %vm648 = vcmp.eq.s32.totalorder %v640, 1
          %vm649 = vcmp.eq.s32.totalorder %v641, 1
          %vm650 = vcmp.eq.s32.totalorder %v642, 1
          %vm651 = vcmp.eq.s32.totalorder %v643, 1
          %v653 = vperm.slane %v618, 0
          %v655 = vsel %vm644, %v653, %v635
          %v656 = vsel %vm645, %v653, %v634
          %v657 = vsel %vm646, %v653, %v633
          %v658 = vsel %vm647, %v653, %v632
          %v659 = vsel %vm648, %v653, %v631
          %v660 = vsel %vm649, %v653, %v630
          %v661 = vsel %vm650, %v653, %v629
          %v662 = vsel %vm651, %v653, %v628
          %v663 = vsub.f32 %v655, %v593
          %v664 = vsub.f32 %v656, %v594
          %v665 = vsub.f32 %v657, %v595
          %v666 = vsub.f32 %v658, %v596
          %v667 = vsub.f32 %v659, %v597
          %v668 = vsub.f32 %v660, %v598
          %v669 = vsub.f32 %v661, %v599
          %v670 = vsub.f32 %v662, %v600
          %v671 = vperm.slane %v390, 2
          %v672 = vmul.f32 %v663, %v671
          %v673 = vmul.f32 %v664, %v671
          %v674 = vmul.f32 %v665, %v671
          %v675 = vmul.f32 %v666, %v671
          %v676 = vmul.f32 %v667, %v671
          %v677 = vmul.f32 %v668, %v671
          %v678 = vmul.f32 %v669, %v671
          %v679 = vmul.f32 %v670, %v671
          %v680 = vadd.f32 %v593, %v672
          %v681 = vadd.f32 %v594, %v673
          %v682 = vadd.f32 %v595, %v674
          %v683 = vadd.f32 %v596, %v675
          %v684 = vadd.f32 %v597, %v676
          %v685 = vadd.f32 %v598, %v677
          %v686 = vadd.f32 %v599, %v678
          %v687 = vadd.f32 %v600, %v679
          %688 = vst.msk [vmem:[#allocation3] sm:$0xff] %vm399, %v680
          %689 = vst.msk [vmem:[#allocation3 + $0x8] sm:$0xff] %vm399, %v681
          %690 = vst.msk [vmem:[#allocation3 + $0x10] sm:$0xff] %vm399, %v682
          %691 = vst.msk [vmem:[#allocation3 + $0x18] sm:$0xff] %vm399, %v683
          %692 = vst.msk [vmem:[#allocation3 + $0x20] sm:$0xff] %vm399, %v684
          %693 = vst.msk [vmem:[#allocation3 + $0x28] sm:$0xff] %vm399, %v685
          %694 = vst.msk [vmem:[#allocation3 + $0x30] sm:$0xff] %vm399, %v686
          %695 = vst.msk [vmem:[#allocation3 + $0x38] sm:$0xff] %vm399, %v687
          %v696 = vperm.slane %v390, 3
          %v697 = vmul.f32 %v663, %v696
          %v698 = vmul.f32 %v664, %v696
          %v699 = vmul.f32 %v665, %v696
          %v700 = vmul.f32 %v666, %v696
          %v701 = vmul.f32 %v667, %v696
          %v702 = vmul.f32 %v668, %v696
          %v703 = vmul.f32 %v669, %v696
          %v704 = vmul.f32 %v670, %v696
          %v705 = vadd.f32 %v593, %v697
          %v706 = vadd.f32 %v594, %v698
          %v707 = vadd.f32 %v595, %v699
          %v708 = vadd.f32 %v596, %v700
          %v709 = vadd.f32 %v597, %v701
          %v710 = vadd.f32 %v598, %v702
          %v711 = vadd.f32 %v599, %v703
          %v712 = vadd.f32 %v600, %v704
          %v713 = vld [vmem:[%s5] sm:$0xff]
          %v714 = vld [vmem:[%s5 + $0x8] sm:$0xff]
          %v715 = vld [vmem:[%s5 + $0x10] sm:$0xff]
          %v716 = vld [vmem:[%s5 + $0x18] sm:$0xff]
          %v717 = vld [vmem:[%s5 + $0x20] sm:$0xff]
          %v718 = vld [vmem:[%s5 + $0x28] sm:$0xff]
          %v719 = vld [vmem:[%s5 + $0x30] sm:$0xff]
          %v720 = vld [vmem:[%s5 + $0x38] sm:$0xff]
          %v722 = vsel %vm399, %v705, 0
          %v725 = vsel %vm399, %v706, 0
          %v728 = vsel %vm399, %v707, 0
          %v731 = vsel %vm399, %v708, 0
          %v734 = vsel %vm399, %v709, 0
          %v737 = vsel %vm399, %v710, 0
          %v740 = vsel %vm399, %v711, 0
          %v743 = vsel %vm399, %v712, 0
          %745 = vmatpush.msra.mxu0 0.0
          %746 = vmatpush.msra.mxu0 0.0
          %747 = vmatpush.msra.mxu0 0.0
          %748 = vmatpush.msra.mxu0 0.0
          %749 = vmatpush.msra.mxu0 0.0
          %750 = vmatpush.msra.mxu0 0.0
          %751 = vmatpush.msra.mxu0 0.0
          %752 = vmatpush.msra.mxu0 0.0
          %753 = vmatpush.msra.mxu0 %v720
          %754 = vmatpush.msra.mxu0 %v719
          %755 = vmatpush.msra.mxu0 %v718
          %756 = vmatpush.msra.mxu0 %v717
          %757 = vmatpush.msra.mxu0 %v716
          %758 = vmatpush.msra.mxu0 %v715
          %759 = vmatpush.msra.mxu0 %v714
          %760 = vmatpush.msra.mxu0 %v713
          %761 = vmatmul.f32.gmra.mxu0 %v722
          %v762 = vpop.f32.mrf.mxu0
          %v763 = vadd.f32 0.0, %v762
          %764 = vmatmul.f32.gmra.mxu0 %v725
          %v765 = vpop.f32.mrf.mxu0
          %v766 = vadd.f32 0.0, %v765
          %767 = vmatmul.f32.gmra.mxu0 %v728
          %v768 = vpop.f32.mrf.mxu0
          %v769 = vadd.f32 0.0, %v768
          %770 = vmatmul.f32.gmra.mxu0 %v731
          %v771 = vpop.f32.mrf.mxu0
          %v772 = vadd.f32 0.0, %v771
          %773 = vmatmul.f32.gmra.mxu0 %v734
          %v774 = vpop.f32.mrf.mxu0
          %v775 = vadd.f32 0.0, %v774
          %776 = vmatmul.f32.gmra.mxu0 %v737
          %v777 = vpop.f32.mrf.mxu0
          %v778 = vadd.f32 0.0, %v777
          %779 = vmatmul.f32.gmra.mxu0 %v740
          %v780 = vpop.f32.mrf.mxu0
          %v781 = vadd.f32 0.0, %v780
          %782 = vmatmul.f32.gmra.mxu0 %v743
          %v783 = vpop.f32.mrf.mxu0
          %v784 = vadd.f32 0.0, %v783
          %785 = vdwg.mxu0
          %v786 = vxor.u32 %v763, 2147483648
          %v787 = vxor.u32 %v766, 2147483648
          %v788 = vxor.u32 %v769, 2147483648
          %v789 = vxor.u32 %v772, 2147483648
          %v790 = vxor.u32 %v775, 2147483648
          %v791 = vxor.u32 %v778, 2147483648
          %v792 = vxor.u32 %v781, 2147483648
          %v793 = vxor.u32 %v784, 2147483648
          %v794 = vmul.f32 %v786, 1.442695
          %v795 = vpow.pop %v794
          %v796 = vmul.f32 %v787, 1.442695
          %v797 = vpow.pop %v796
          %v798 = vmul.f32 %v788, 1.442695
          %v799 = vpow.pop %v798
          %v800 = vmul.f32 %v789, 1.442695
          %v801 = vpow.pop %v800
          %v802 = vmul.f32 %v790, 1.442695
          %v803 = vpow.pop %v802
          %v804 = vmul.f32 %v791, 1.442695
          %v805 = vpow.pop %v804
          %v806 = vmul.f32 %v792, 1.442695
          %v807 = vpow.pop %v806
          %v808 = vmul.f32 %v793, 1.442695
          %v809 = vpow.pop %v808
          %v810 = vadd.f32 %v795, 1.0
          %v811 = vadd.f32 %v797, 1.0
          %v812 = vadd.f32 %v799, 1.0
          %v813 = vadd.f32 %v801, 1.0
          %v814 = vadd.f32 %v803, 1.0
          %v815 = vadd.f32 %v805, 1.0
          %v816 = vadd.f32 %v807, 1.0
          %v817 = vadd.f32 %v809, 1.0
          %v818 = vrcp.pop %v810
          %v819 = vmul.f32 %v810, %v818
          %v820 = vsub.f32 1.0, %v819
          %v821 = vmul.f32 %v818, %v820
          %v822 = vadd.f32 %v818, %v821
          %vm823 = vweird.f32 %v810
          %vm824 = vweird.f32 %v818
          %vm825 = vmor %vm823, %vm824
          %v826 = vsel %vm825, %v818, %v822
          %v827 = vand.u32 2147483647, %v810
          %vm828 = vcmp.eq.f32.partialorder %v827, 8.507059e+37
          %v829 = vand.u32 %v810, 2147483648
          %v830 = vor.u32 1.1754944e-38, %v829
          %v831 = vsel %vm828, %v830, %v826
          %v832 = vmul.f32 1.0, %v831
          %v833 = vrcp.pop %v811
          %v834 = vmul.f32 %v811, %v833
          %v835 = vsub.f32 1.0, %v834
          %v836 = vmul.f32 %v833, %v835
          %v837 = vadd.f32 %v833, %v836
          %vm838 = vweird.f32 %v811
          %vm839 = vweird.f32 %v833
          %vm840 = vmor %vm838, %vm839
          %v841 = vsel %vm840, %v833, %v837
          %v842 = vand.u32 2147483647, %v811
          %vm843 = vcmp.eq.f32.partialorder %v842, 8.507059e+37
          %v844 = vand.u32 %v811, 2147483648
          %v845 = vor.u32 1.1754944e-38, %v844
          %v846 = vsel %vm843, %v845, %v841
          %v847 = vmul.f32 1.0, %v846
          %v848 = vrcp.pop %v812
          %v849 = vmul.f32 %v812, %v848
          %v850 = vsub.f32 1.0, %v849
          %v851 = vmul.f32 %v848, %v850
          %v852 = vadd.f32 %v848, %v851
          %vm853 = vweird.f32 %v812
          %vm854 = vweird.f32 %v848
          %vm855 = vmor %vm853, %vm854
          %v856 = vsel %vm855, %v848, %v852
          %v857 = vand.u32 2147483647, %v812
          %vm858 = vcmp.eq.f32.partialorder %v857, 8.507059e+37
          %v859 = vand.u32 %v812, 2147483648
          %v860 = vor.u32 1.1754944e-38, %v859
          %v861 = vsel %vm858, %v860, %v856
          %v862 = vmul.f32 1.0, %v861
          %v863 = vrcp.pop %v813
          %v864 = vmul.f32 %v813, %v863
          %v865 = vsub.f32 1.0, %v864
          %v866 = vmul.f32 %v863, %v865
          %v867 = vadd.f32 %v863, %v866
          %vm868 = vweird.f32 %v813
          %vm869 = vweird.f32 %v863
          %vm870 = vmor %vm868, %vm869
          %v871 = vsel %vm870, %v863, %v867
          %v872 = vand.u32 2147483647, %v813
          %vm873 = vcmp.eq.f32.partialorder %v872, 8.507059e+37
          %v874 = vand.u32 %v813, 2147483648
          %v875 = vor.u32 1.1754944e-38, %v874
          %v876 = vsel %vm873, %v875, %v871
          %v877 = vmul.f32 1.0, %v876
          %v878 = vrcp.pop %v814
          %v879 = vmul.f32 %v814, %v878
          %v880 = vsub.f32 1.0, %v879
          %v881 = vmul.f32 %v878, %v880
          %v882 = vadd.f32 %v878, %v881
          %vm883 = vweird.f32 %v814
          %vm884 = vweird.f32 %v878
          %vm885 = vmor %vm883, %vm884
          %v886 = vsel %vm885, %v878, %v882
          %v887 = vand.u32 2147483647, %v814
          %vm888 = vcmp.eq.f32.partialorder %v887, 8.507059e+37
          %v889 = vand.u32 %v814, 2147483648
          %v890 = vor.u32 1.1754944e-38, %v889
          %v891 = vsel %vm888, %v890, %v886
          %v892 = vmul.f32 1.0, %v891
          %v893 = vrcp.pop %v815
          %v894 = vmul.f32 %v815, %v893
          %v895 = vsub.f32 1.0, %v894
          %v896 = vmul.f32 %v893, %v895
          %v897 = vadd.f32 %v893, %v896
          %vm898 = vweird.f32 %v815
          %vm899 = vweird.f32 %v893
          %vm900 = vmor %vm898, %vm899
          %v901 = vsel %vm900, %v893, %v897
          %v902 = vand.u32 2147483647, %v815
          %vm903 = vcmp.eq.f32.partialorder %v902, 8.507059e+37
          %v904 = vand.u32 %v815, 2147483648
          %v905 = vor.u32 1.1754944e-38, %v904
          %v906 = vsel %vm903, %v905, %v901
          %v907 = vmul.f32 1.0, %v906
          %v908 = vrcp.pop %v816
          %v909 = vmul.f32 %v816, %v908
          %v910 = vsub.f32 1.0, %v909
          %v911 = vmul.f32 %v908, %v910
          %v912 = vadd.f32 %v908, %v911
          %vm913 = vweird.f32 %v816
          %vm914 = vweird.f32 %v908
          %vm915 = vmor %vm913, %vm914
          %v916 = vsel %vm915, %v908, %v912
          %v917 = vand.u32 2147483647, %v816
          %vm918 = vcmp.eq.f32.partialorder %v917, 8.507059e+37
          %v919 = vand.u32 %v816, 2147483648
          %v920 = vor.u32 1.1754944e-38, %v919
          %v921 = vsel %vm918, %v920, %v916
          %v922 = vmul.f32 1.0, %v921
          %v923 = vrcp.pop %v817
          %v924 = vmul.f32 %v817, %v923
          %v925 = vsub.f32 1.0, %v924
          %v926 = vmul.f32 %v923, %v925
          %v927 = vadd.f32 %v923, %v926
          %vm928 = vweird.f32 %v817
          %vm929 = vweird.f32 %v923
          %vm930 = vmor %vm928, %vm929
          %v931 = vsel %vm930, %v923, %v927
          %v932 = vand.u32 2147483647, %v817
          %vm933 = vcmp.eq.f32.partialorder %v932, 8.507059e+37
          %v934 = vand.u32 %v817, 2147483648
          %v935 = vor.u32 1.1754944e-38, %v934
          %v936 = vsel %vm933, %v935, %v931
          %v937 = vmul.f32 1.0, %v936
          %938 = vst.msk [vmem:[#allocation4] sm:$0xff] %vm399, %v832
          %939 = vst.msk [vmem:[#allocation4 + $0x8] sm:$0xff] %vm399, %v847
          %940 = vst.msk [vmem:[#allocation4 + $0x10] sm:$0xff] %vm399, %v862
          %941 = vst.msk [vmem:[#allocation4 + $0x18] sm:$0xff] %vm399, %v877
          %942 = vst.msk [vmem:[#allocation4 + $0x20] sm:$0xff] %vm399, %v892
          %943 = vst.msk [vmem:[#allocation4 + $0x28] sm:$0xff] %vm399, %v907
          %944 = vst.msk [vmem:[#allocation4 + $0x30] sm:$0xff] %vm399, %v922
          %945 = vst.msk [vmem:[#allocation4 + $0x38] sm:$0xff] %vm399, %v937
        $region86: #{rwkv6_feed_forward.1} parent=77 // pred_fallthru
          _
        %v946 = vld [vmem:[#allocation3] sm:$0xff]
        %v947 = vld [vmem:[#allocation3 + $0x8] sm:$0xff]
        %v948 = vld [vmem:[#allocation3 + $0x10] sm:$0xff]
        %v949 = vld [vmem:[#allocation3 + $0x18] sm:$0xff]
        %v950 = vld [vmem:[#allocation3 + $0x20] sm:$0xff]
        %v951 = vld [vmem:[#allocation3 + $0x28] sm:$0xff]
        %v952 = vld [vmem:[#allocation3 + $0x30] sm:$0xff]
        %v953 = vld [vmem:[#allocation3 + $0x38] sm:$0xff]
        %v954 = vld [vmem:[%s325] sm:$0xff]
        %v955 = vld [vmem:[%s325 + $0x8] sm:$0xff]
        %v956 = vld [vmem:[%s325 + $0x10] sm:$0xff]
        %v957 = vld [vmem:[%s325 + $0x18] sm:$0xff]
        %v958 = vld [vmem:[%s325 + $0x20] sm:$0xff]
        %v959 = vld [vmem:[%s325 + $0x28] sm:$0xff]
        %v960 = vld [vmem:[%s325 + $0x30] sm:$0xff]
        %v961 = vld [vmem:[%s325 + $0x38] sm:$0xff]
        %vm962 = vcmask 523264
        %v964 = vsel %vm962, %v946, 0
        %v967 = vsel %vm962, %v947, 0
        %v970 = vsel %vm962, %v948, 0
        %v973 = vsel %vm962, %v949, 0
        %v976 = vsel %vm962, %v950, 0
        %v979 = vsel %vm962, %v951, 0
        %v982 = vsel %vm962, %v952, 0
        %v985 = vsel %vm962, %v953, 0
        %987 = vmatpush.msra.mxu0 0.0
        %988 = vmatpush.msra.mxu0 0.0
        %989 = vmatpush.msra.mxu0 0.0
        %990 = vmatpush.msra.mxu0 0.0
        %991 = vmatpush.msra.mxu0 0.0
        %992 = vmatpush.msra.mxu0 0.0
        %993 = vmatpush.msra.mxu0 0.0
        %994 = vmatpush.msra.mxu0 0.0
        %995 = vmatpush.msra.mxu0 %v961
        %996 = vmatpush.msra.mxu0 %v960
        %997 = vmatpush.msra.mxu0 %v959
        %998 = vmatpush.msra.mxu0 %v958
        %999 = vmatpush.msra.mxu0 %v957
        %1000 = vmatpush.msra.mxu0 %v956
        %1001 = vmatpush.msra.mxu0 %v955
        %1002 = vmatpush.msra.mxu0 %v954
        %1003 = vmatmul.f32.gmra.mxu0 %v964
        %v1004 = vpop.f32.mrf.mxu0
        %v1005 = vadd.f32 0.0, %v1004
        %1006 = vmatmul.f32.gmra.mxu0 %v967
        %v1007 = vpop.f32.mrf.mxu0
        %v1008 = vadd.f32 0.0, %v1007
        %1009 = vmatmul.f32.gmra.mxu0 %v970
        %v1010 = vpop.f32.mrf.mxu0
        %v1011 = vadd.f32 0.0, %v1010
        %1012 = vmatmul.f32.gmra.mxu0 %v973
        %v1013 = vpop.f32.mrf.mxu0
        %v1014 = vadd.f32 0.0, %v1013
        %1015 = vmatmul.f32.gmra.mxu0 %v976
        %v1016 = vpop.f32.mrf.mxu0
        %v1017 = vadd.f32 0.0, %v1016
        %1018 = vmatmul.f32.gmra.mxu0 %v979
        %v1019 = vpop.f32.mrf.mxu0
        %v1020 = vadd.f32 0.0, %v1019
        %1021 = vmatmul.f32.gmra.mxu0 %v982
        %v1022 = vpop.f32.mrf.mxu0
        %v1023 = vadd.f32 0.0, %v1022
        %1024 = vmatmul.f32.gmra.mxu0 %v985
        %v1025 = vpop.f32.mrf.mxu0
        %v1026 = vadd.f32 0.0, %v1025
        %1027 = vdwg.mxu0
        %v1028 = vmax.f32 %v1005, 0.0
        %v1029 = vmax.f32 %v1008, 0.0
        %v1030 = vmax.f32 %v1011, 0.0
        %v1031 = vmax.f32 %v1014, 0.0
        %v1032 = vmax.f32 %v1017, 0.0
        %v1033 = vmax.f32 %v1020, 0.0
        %v1034 = vmax.f32 %v1023, 0.0
        %v1035 = vmax.f32 %v1026, 0.0
        %v1036 = vmul.f32 %v1028, %v1028
        %v1037 = vmul.f32 %v1029, %v1029
        %v1038 = vmul.f32 %v1030, %v1030
        %v1039 = vmul.f32 %v1031, %v1031
        %v1040 = vmul.f32 %v1032, %v1032
        %v1041 = vmul.f32 %v1033, %v1033
        %v1042 = vmul.f32 %v1034, %v1034
        %v1043 = vmul.f32 %v1035, %v1035
        %v1044 = vld [vmem:[%s378] sm:$0xff]
        %v1045 = vld [vmem:[%s378 + $0x8] sm:$0xff]
        %v1046 = vld [vmem:[%s378 + $0x10] sm:$0xff]
        %v1047 = vld [vmem:[%s378 + $0x18] sm:$0xff]
        %v1048 = vld [vmem:[%s378 + $0x20] sm:$0xff]
        %v1049 = vld [vmem:[%s378 + $0x28] sm:$0xff]
        %v1050 = vld [vmem:[%s378 + $0x30] sm:$0xff]
        %v1051 = vld [vmem:[%s378 + $0x38] sm:$0xff]
        %v1052 = vld [vmem:[%s378 + $0x40] sm:$0xff]
        %v1053 = vld [vmem:[%s378 + $0x48] sm:$0xff]
        %v1054 = vld [vmem:[%s378 + $0x50] sm:$0xff]
        %v1055 = vld [vmem:[%s378 + $0x58] sm:$0xff]
        %v1056 = vld [vmem:[%s378 + $0x60] sm:$0xff]
        %v1057 = vld [vmem:[%s378 + $0x68] sm:$0xff]
        %v1058 = vld [vmem:[%s378 + $0x70] sm:$0xff]
        %v1059 = vld [vmem:[%s378 + $0x78] sm:$0xff]
        %1060 = vmatpush.msra.mxu0 %v1059
        %1061 = vmatpush.msra.mxu0 %v1058
        %1062 = vmatpush.msra.mxu0 %v1057
        %1063 = vmatpush.msra.mxu0 %v1056
        %1064 = vmatpush.msra.mxu0 %v1055
        %1065 = vmatpush.msra.mxu0 %v1054
        %1066 = vmatpush.msra.mxu0 %v1053
        %1067 = vmatpush.msra.mxu0 %v1052
        %1068 = vmatpush.msra.mxu0 %v1051
        %1069 = vmatpush.msra.mxu0 %v1050
        %1070 = vmatpush.msra.mxu0 %v1049
        %1071 = vmatpush.msra.mxu0 %v1048
        %1072 = vmatpush.msra.mxu0 %v1047
        %1073 = vmatpush.msra.mxu0 %v1046
        %1074 = vmatpush.msra.mxu0 %v1045
        %1075 = vmatpush.msra.mxu0 %v1044
        %1076 = vmatmul.f32.gmra.mxu0 %v1036
        %v1077 = vpop.f32.mrf.mxu0
        %v1078 = vadd.f32 0.0, %v1077
        %1079 = vmatmul.f32.gmra.mxu0 %v1037
        %v1080 = vpop.f32.mrf.mxu0
        %v1081 = vadd.f32 0.0, %v1080
        %1082 = vmatmul.f32.gmra.mxu0 %v1038
        %v1083 = vpop.f32.mrf.mxu0
        %v1084 = vadd.f32 0.0, %v1083
        %1085 = vmatmul.f32.gmra.mxu0 %v1039
        %v1086 = vpop.f32.mrf.mxu0
        %v1087 = vadd.f32 0.0, %v1086
        %1088 = vmatmul.f32.gmra.mxu0 %v1040
        %v1089 = vpop.f32.mrf.mxu0
        %v1090 = vadd.f32 0.0, %v1089
        %1091 = vmatmul.f32.gmra.mxu0 %v1041
        %v1092 = vpop.f32.mrf.mxu0
        %v1093 = vadd.f32 0.0, %v1092
        %1094 = vmatmul.f32.gmra.mxu0 %v1042
        %v1095 = vpop.f32.mrf.mxu0
        %v1096 = vadd.f32 0.0, %v1095
        %1097 = vmatmul.f32.gmra.mxu0 %v1043
        %v1098 = vpop.f32.mrf.mxu0
        %v1099 = vadd.f32 0.0, %v1098
        %1100 = vdwg.mxu0
        // Predicated region
        $region87: #{rwkv6_feed_forward.1} parent=77 // pred_check
          %p1101 = pneg %p386
        $region88: #{rwkv6_feed_forward.1} parent=77 // pred_check_branch
          %1103 = sbr.rel (%p1101) target = $region90
        $region89: #{rwkv6_feed_forward.1} parent=77 // pred_region
          %1104 = vst.msk [vmem:[#allocation2] sm:$0xff] %vm962, %v1078
          %1105 = vst.msk [vmem:[#allocation2 + $0x8] sm:$0xff] %vm962, %v1081
          %1106 = vst.msk [vmem:[#allocation2 + $0x10] sm:$0xff] %vm962, %v1084
          %1107 = vst.msk [vmem:[#allocation2 + $0x18] sm:$0xff] %vm962, %v1087
          %1108 = vst.msk [vmem:[#allocation2 + $0x20] sm:$0xff] %vm962, %v1090
          %1109 = vst.msk [vmem:[#allocation2 + $0x28] sm:$0xff] %vm962, %v1093
          %1110 = vst.msk [vmem:[#allocation2 + $0x30] sm:$0xff] %vm962, %v1096
          %1111 = vst.msk [vmem:[#allocation2 + $0x38] sm:$0xff] %vm962, %v1099
        $region90: #{rwkv6_feed_forward.1} parent=77 // pred_fallthru
          _
        %p1112 = scmp.ne.s32.totalorder %s22, 0
        // Predicated region
        $region91: #{rwkv6_feed_forward.1} parent=77 // pred_check
          %p1113 = pneg %p1112
        $region92: #{rwkv6_feed_forward.1} parent=77 // pred_check_branch
          %1115 = sbr.rel (%p1113) target = $region94
        $region93: #{rwkv6_feed_forward.1} parent=77 // pred_region
          %v1116 = vld [vmem:[#allocation2] sm:$0xff]
          %v1117 = vld [vmem:[#allocation2 + $0x8] sm:$0xff]
          %v1118 = vld [vmem:[#allocation2 + $0x10] sm:$0xff]
          %v1119 = vld [vmem:[#allocation2 + $0x18] sm:$0xff]
          %v1120 = vld [vmem:[#allocation2 + $0x20] sm:$0xff]
          %v1121 = vld [vmem:[#allocation2 + $0x28] sm:$0xff]
          %v1122 = vld [vmem:[#allocation2 + $0x30] sm:$0xff]
          %v1123 = vld [vmem:[#allocation2 + $0x38] sm:$0xff]
          %v1124 = vadd.f32 %v1116, %v1078
          %v1125 = vadd.f32 %v1117, %v1081
          %v1126 = vadd.f32 %v1118, %v1084
          %v1127 = vadd.f32 %v1119, %v1087
          %v1128 = vadd.f32 %v1120, %v1090
          %v1129 = vadd.f32 %v1121, %v1093
          %v1130 = vadd.f32 %v1122, %v1096
          %v1131 = vadd.f32 %v1123, %v1099
          %1132 = vst.msk [vmem:[#allocation2] sm:$0xff] %vm962, %v1124
          %1133 = vst.msk [vmem:[#allocation2 + $0x8] sm:$0xff] %vm962, %v1125
          %1134 = vst.msk [vmem:[#allocation2 + $0x10] sm:$0xff] %vm962, %v1126
          %1135 = vst.msk [vmem:[#allocation2 + $0x18] sm:$0xff] %vm962, %v1127
          %1136 = vst.msk [vmem:[#allocation2 + $0x20] sm:$0xff] %vm962, %v1128
          %1137 = vst.msk [vmem:[#allocation2 + $0x28] sm:$0xff] %vm962, %v1129
          %1138 = vst.msk [vmem:[#allocation2 + $0x30] sm:$0xff] %vm962, %v1130
          %1139 = vst.msk [vmem:[#allocation2 + $0x38] sm:$0xff] %vm962, %v1131
        $region94: #{rwkv6_feed_forward.1} parent=77 // pred_fallthru
          _
        %p1140 = scmp.eq.s32.totalorder %s22, 1
        // Predicated region
        $region95: #{rwkv6_feed_forward.1} parent=77 // pred_check
          %p1141 = pneg %p1140
        $region96: #{rwkv6_feed_forward.1} parent=77 // pred_check_branch
          %1143 = sbr.rel (%p1141) target = $region98
        $region97: #{rwkv6_feed_forward.1} parent=77 // pred_region
          %v1144 = vld [vmem:[#allocation4] sm:$0xff]
          %v1145 = vld [vmem:[#allocation4 + $0x8] sm:$0xff]
          %v1146 = vld [vmem:[#allocation4 + $0x10] sm:$0xff]
          %v1147 = vld [vmem:[#allocation4 + $0x18] sm:$0xff]
          %v1148 = vld [vmem:[#allocation4 + $0x20] sm:$0xff]
          %v1149 = vld [vmem:[#allocation4 + $0x28] sm:$0xff]
          %v1150 = vld [vmem:[#allocation4 + $0x30] sm:$0xff]
          %v1151 = vld [vmem:[#allocation4 + $0x38] sm:$0xff]
          %v1152 = vld [vmem:[#allocation2] sm:$0xff]
          %v1153 = vld [vmem:[#allocation2 + $0x8] sm:$0xff]
          %v1154 = vld [vmem:[#allocation2 + $0x10] sm:$0xff]
          %v1155 = vld [vmem:[#allocation2 + $0x18] sm:$0xff]
          %v1156 = vld [vmem:[#allocation2 + $0x20] sm:$0xff]
          %v1157 = vld [vmem:[#allocation2 + $0x28] sm:$0xff]
          %v1158 = vld [vmem:[#allocation2 + $0x30] sm:$0xff]
          %v1159 = vld [vmem:[#allocation2 + $0x38] sm:$0xff]
          %v1160 = vmul.f32 %v1144, %v1152
          %v1161 = vmul.f32 %v1145, %v1153
          %v1162 = vmul.f32 %v1146, %v1154
          %v1163 = vmul.f32 %v1147, %v1155
          %v1164 = vmul.f32 %v1148, %v1156
          %v1165 = vmul.f32 %v1149, %v1157
          %v1166 = vmul.f32 %v1150, %v1158
          %v1167 = vmul.f32 %v1151, %v1159
          %v1168 = vld [vmem:[%s369] sm:$0xff]
          %v1169 = vld [vmem:[%s369 + $0x8] sm:$0xff]
          %v1170 = vld [vmem:[%s369 + $0x10] sm:$0xff]
          %v1171 = vld [vmem:[%s369 + $0x18] sm:$0xff]
          %v1172 = vld [vmem:[%s369 + $0x20] sm:$0xff]
          %v1173 = vld [vmem:[%s369 + $0x28] sm:$0xff]
          %v1174 = vld [vmem:[%s369 + $0x30] sm:$0xff]
          %v1175 = vld [vmem:[%s369 + $0x38] sm:$0xff]
          %v1176 = vadd.f32 %v1160, %v1168
          %v1177 = vadd.f32 %v1161, %v1169
          %v1178 = vadd.f32 %v1162, %v1170
          %v1179 = vadd.f32 %v1163, %v1171
          %v1180 = vadd.f32 %v1164, %v1172
          %v1181 = vadd.f32 %v1165, %v1173
          %v1182 = vadd.f32 %v1166, %v1174
          %v1183 = vadd.f32 %v1167, %v1175
          %1184 = vst.msk [vmem:[%s384] sm:$0xff] %vm962, %v1176
          %1185 = vst.msk [vmem:[%s384 + $0x8] sm:$0xff] %vm962, %v1177
          %1186 = vst.msk [vmem:[%s384 + $0x10] sm:$0xff] %vm962, %v1178
          %1187 = vst.msk [vmem:[%s384 + $0x18] sm:$0xff] %vm962, %v1179
          %1188 = vst.msk [vmem:[%s384 + $0x20] sm:$0xff] %vm962, %v1180
          %1189 = vst.msk [vmem:[%s384 + $0x28] sm:$0xff] %vm962, %v1181
          %1190 = vst.msk [vmem:[%s384 + $0x30] sm:$0xff] %vm962, %v1182
          %1191 = vst.msk [vmem:[%s384 + $0x38] sm:$0xff] %vm962, %v1183
        $region98: #{rwkv6_feed_forward.1} parent=77 // pred_fallthru
          _
        %s1192 = smul.u32 8, %s21
        %p1193 = scmp.lt.s32.totalorder %s1192, 31
        %s1194 = scalar_select %p1193, %s1192, 31
        %s1195 = smul.addr %s1194, 8
        %s1196 = scalar_lea.vmem %s6, %s1195
        // Predicated region
        $region99: #{rwkv6_feed_forward.1} parent=77 // pred_check
          %p1197 = pneg %p193
        $region100: #{rwkv6_feed_forward.1} parent=77 // pred_check_branch
          %1199 = sbr.rel (%p1197) target = $region102
        $region101: #{rwkv6_feed_forward.1} parent=77 // pred_region
          %s1200 = smul.u32 8, %s21
        $region102: #{rwkv6_feed_forward.1} parent=77 // pred_fallthru
          _
      $region78: #{rwkv6_feed_forward.1} parent=5 // pred_fallthru
        _
      %p1201 = scmp.le.s32.totalorder 2, %s12
      // Predicated region
      $region103: #{rwkv6_feed_forward.1} parent=5 // pred_check
        %p1202 = pneg %p1201
      $region104: #{rwkv6_feed_forward.1} parent=5 // pred_check_branch
        %1204 = sbr.rel (%p1202) target = $region106
      $region105: #{rwkv6_feed_forward.1} parent=5 // pred_region
        %s1205 = ssub.s32 %s12, 2
        // Predicated region
        $region107: #{rwkv6_feed_forward.1} parent=105 // pred_check
          %p1206 = pneg %p199
        $region108: #{rwkv6_feed_forward.1} parent=105 // pred_check_branch
          %1208 = sbr.rel (%p1206) target = $region110
        $region109: #{rwkv6_feed_forward.1} parent=105 // pred_region
          %s1209 = smul.u32 8, %s23
          %p1210 = scmp.lt.s32.totalorder %s1209, 31
          %s1211 = scalar_select %p1210, %s1209, 31
          %s1212 = smul.addr %s1211, 8
          %s1213 = scalar_lea.vmem %s6, %s1212
        $region110: #{rwkv6_feed_forward.1} parent=105 // pred_fallthru
          _
      $region106: #{rwkv6_feed_forward.1} parent=5 // pred_fallthru
        _
    $region6: #{rwkv6_feed_forward.1} parent=1 // loop_footer
      %s16 = sadd.s32 1, %s12
    $region7: #{rwkv6_feed_forward.1} parent=1 // loop_footer_branch
      %11 = sbr.rel target = $region3
    $region8: #{rwkv6_feed_forward.1} parent=1 // loop_exit
      _

</llo_original>
